<compile_context>
chip_gen: v5e
topology: v5e:2x2
jax: 0.10.0
libtpu: 0.0.40
codegen_flags: <defaults>
</compile_context>

<pallas_src>
import functools
import math

import jax
import jax.numpy as jnp
from jax.experimental import pallas as pl
from jax.experimental.pallas import tpu as pltpu


def _layer_norm(x, gamma, beta, eps=1e-5):
    mean = jnp.mean(x, axis=-1, keepdims=True)
    var = jnp.mean((x - mean) ** 2, axis=-1, keepdims=True)
    return (x - mean) * jax.lax.rsqrt(var + eps) * gamma + beta


def encoder_block_kernel(x_ref,
                         wqkv_ref, bqkv_ref, wo_ref, bo_ref,
                         g1_ref, be1_ref, w1_ref, bf1_ref,
                         w2_ref, bf2_ref, g2_ref, be2_ref,
                         o_ref,
                         q_scr, k_scr, v_scr, ctx_scr,
                         *, num_heads, q_tile):
    _, T, E = x_ref.shape
    H = num_heads
    hd = E // H
    cdt = x_ref.dtype          # compute dtype (bf16)
    f32 = jnp.float32
    qi = pl.program_id(1)

    # ---- Phase 1: once per batch element (qi == 0) ---------------------------
    # Fused QKV projection; stash pre-scaled Q and K/V head-major in VMEM
    # scratch so every query tile reuses them (no recompute, no re-DMA).
    @pl.when(qi == 0)
    def _project_qkv():
        x_full = x_ref[0]                                            # (T, E) bf16
        qkv = jnp.dot(x_full, wqkv_ref[...],
                      preferred_element_type=f32) + bqkv_ref[...]    # (T, 3E) f32
        scale = 1.0 / math.sqrt(hd)
        for h in range(H):                    # unrolled; runs once per batch elem
            lo = h * hd
            q_scr[h] = (qkv[:, lo:lo + hd] * scale).astype(cdt)
            k_scr[h] = qkv[:, E + lo:E + lo + hd].astype(cdt)
            v_scr[h] = qkv[:, 2 * E + lo:2 * E + lo + hd].astype(cdt)

    # ---- Phase 2: per query tile ---------------------------------------------
    row0 = pl.multiple_of(qi * q_tile, q_tile)
    q_blk = q_scr[:, pl.ds(row0, q_tile), :]                         # (H, TQ, hd)

    # Batched-head attention (scale already folded into Q).
    s = jnp.einsum('hqd,hkd->hqk', q_blk, k_scr[...],
                   preferred_element_type=f32)                       # (H, TQ, T)
    s = s - jnp.max(s, axis=-1, keepdims=True)
    p = jnp.exp(s)
    p = p * pl.reciprocal(jnp.sum(p, axis=-1, keepdims=True), approx=True)
    ctx = jnp.einsum('hqk,hkd->hqd', p.astype(cdt), v_scr[...],
                     preferred_element_type=f32)                     # (H, TQ, hd)

    # Merge heads into a (TQ, E) scratch (no jnp.concatenate lane reassembly).
    for h in range(H):
        ctx_scr[:, h * hd:(h + 1) * hd] = ctx[h].astype(cdt)

    # Output projection.
    # TODO(synk): dropout layers treated as identity (eval-mode semantics).
    attn = jnp.dot(ctx_scr[...], wo_ref[...],
                   preferred_element_type=f32) + bo_ref[...]         # (TQ, E) f32

    # Residual + LayerNorm 1 (f32 elementwise).
    x_res = x_ref[0, pl.ds(row0, q_tile), :].astype(f32)
    x1 = _layer_norm(x_res + attn, g1_ref[...], be1_ref[...])

    # FeedForward: fc1 -> ReLU -> fc2.
    h1 = jnp.dot(x1.astype(cdt), w1_ref[...],
                 preferred_element_type=f32) + bf1_ref[...]
    h1 = jnp.maximum(h1, 0.0)
    ff = jnp.dot(h1.astype(cdt), w2_ref[...],
                 preferred_element_type=f32) + bf2_ref[...]

    # Residual + LayerNorm 2.
    x2 = _layer_norm(x1 + ff, g2_ref[...], be2_ref[...])
    o_ref[0] = x2.astype(o_ref.dtype)


def transformer_encoder_block(x, params, num_heads, *, q_tile=None,
                              compute_dtype=jnp.bfloat16):
    """x: (B, T, E) float32.  params: dict of pre-transposed ([in, out]) weights."""
    B, T, E = x.shape
    F = params["w1"].shape[1]
    H = num_heads
    assert E % H == 0
    hd = E // H

    if q_tile is None:
        q_tile = T if T <= 128 else 128
    assert T % q_tile == 0
    assert q_tile == T or q_tile % 8 == 0   # (8,128) sublane constraint
    nq = T // q_tile

    cdt = compute_dtype
    f32 = jnp.float32

    # Fused QKV weight/bias: one MXU push with 3x the N dimension.
    wqkv = jnp.concatenate([params["wq"], params["wk"], params["wv"]],
                           axis=1).astype(cdt)
    bqkv = jnp.concatenate([params["bq"], params["bk"], params["bv"]],
                           axis=1).astype(f32)

    weight_args = [
        wqkv, bqkv,
        params["wo"].astype(cdt), params["bo"].astype(f32),
        params["g1"].astype(f32), params["be1"].astype(f32),
        params["w1"].astype(cdt), params["bf1"].astype(f32),
        params["w2"].astype(cdt), params["bf2"].astype(f32),
        params["g2"].astype(f32), params["be2"].astype(f32),
    ]

    def rep_spec(shape):
        nd = len(shape)
        return pl.BlockSpec(shape, lambda b, q, _nd=nd: (0,) * _nd)

    # x block index is constant along the query-tile axis, so Pallas fetches the
    # full (T, E) row once per batch element and skips re-DMA for qi > 0.
    in_specs = [pl.BlockSpec((1, T, E), lambda b, q: (b, 0, 0))]
    in_specs += [rep_spec(tuple(w.shape)) for w in weight_args]
    out_specs = pl.BlockSpec((1, q_tile, E), lambda b, q: (b, q, 0))

    scratch_shapes = [
        pltpu.VMEM((H, T, hd), cdt),    # pre-scaled Q, head-major
        pltpu.VMEM((H, T, hd), cdt),    # K
        pltpu.VMEM((H, T, hd), cdt),    # V
        pltpu.VMEM((q_tile, E), cdt),   # merged-head attention context
    ]

    # Explicit VMEM budget (keeps v7x's 64 MiB ceiling honest).
    csz = jnp.dtype(cdt).itemsize
    weight_bytes = sum(int(w.size) * w.dtype.itemsize for w in weight_args)
    block_bytes = T * E * csz + q_tile * E * 4
    scratch_bytes = (3 * H * T * hd + q_tile * E) * csz
    temp_bytes = 4 * (3 * T * E + 2 * H * q_tile * T + q_tile * F + 8 * q_tile * E)
    est = 2 * weight_bytes + 2 * block_bytes + scratch_bytes + temp_bytes
    vmem_limit = int(min(64 * 1024 * 1024, max(16 * 1024 * 1024, 2 * est)))

    flops = B * T * (8 * E * E + 4 * T * E + 4 * E * F)
    cost = pl.CostEstimate(
        flops=int(flops),
        transcendentals=int(B * H * T * T + 2 * B * T),
        bytes_accessed=int(x.size * csz + x.size * 4 + weight_bytes),
    )

    kernel = functools.partial(encoder_block_kernel, num_heads=H, q_tile=q_tile)
    return pl.pallas_call(
        kernel,
        out_shape=jax.ShapeDtypeStruct((B, T, E), x.dtype),
        grid_spec=pltpu.PrefetchScalarGridSpec(
            num_scalar_prefetch=0,
            grid=(B, nq),
            in_specs=in_specs,
            out_specs=out_specs,
            scratch_shapes=scratch_shapes,
        ),
        compiler_params=pltpu.CompilerParams(
            dimension_semantics=("parallel", "arbitrary"),
            vmem_limit_bytes=vmem_limit,
        ),
        cost_estimate=cost,
    )(x.astype(cdt), *weight_args)


def init_params(key, embed_size, num_heads, ff_hidden_dim):
    ks = jax.random.split(key, 8)
    s = 0.02

    def lin(k, fan_in, fan_out):
        # weight stored [in, out] (pre-transposed vs torch's [out, in])
        w = s * jax.random.normal(k, (fan_in, fan_out), jnp.float32)
        b = jnp.zeros((1, fan_out), jnp.float32) + 0.01
        return w, b

    wq, bq = lin(ks[0], embed_size, embed_size)
    wk, bk = lin(ks[1], embed_size, embed_size)
    wv, bv = lin(ks[2], embed_size, embed_size)
    wo, bo = lin(ks[3], embed_size, embed_size)
    w1, bf1 = lin(ks[4], embed_size, ff_hidden_dim)
    w2, bf2 = lin(ks[5], ff_hidden_dim, embed_size)
    g1 = jnp.ones((1, embed_size), jnp.float32)
    be1 = jnp.zeros((1, embed_size), jnp.float32)
    g2 = jnp.ones((1, embed_size), jnp.float32)
    be2 = jnp.zeros((1, embed_size), jnp.float32)
    return dict(wq=wq, bq=bq, wk=wk, bk=bk, wv=wv, bv=bv, wo=wo, bo=bo,
                g1=g1, be1=be1, w1=w1, bf1=bf1, w2=w2, bf2=bf2,
                g2=g2, be2=be2)


def reference(x, params, num_heads):
    """Pure-JAX f32 reference (mirrors the PyTorch forward)."""
    B, T, E = x.shape
    H = num_heads
    hd = E // H

    def split(a):
        return a.reshape(B, T, H, hd).transpose(0, 2, 1, 3)

    q = split(x @ params["wq"] + params["bq"])
    k = split(x @ params["wk"] + params["bk"])
    v = split(x @ params["wv"] + params["bv"])
    s = jnp.einsum('bhqd,bhkd->bhqk', q, k) / math.sqrt(hd)
    p = jax.nn.softmax(s, axis=-1)
    ctx = jnp.einsum('bhqk,bhkd->bhqd', p, v).transpose(0, 2, 1, 3).reshape(B, T, E)
    attn = ctx @ params["wo"] + params["bo"]

    def ln(a, g, b):
        m = a.mean(-1, keepdims=True)
        var = ((a - m) ** 2).mean(-1, keepdims=True)
        return (a - m) * jax.lax.rsqrt(var + 1e-5) * g + b

    x1 = ln(x + attn, params["g1"], params["be1"])
    h = jnp.maximum(x1 @ params["w1"] + params["bf1"], 0.0)
    ff = h @ params["w2"] + params["bf2"]
    return ln(x1 + ff, params["g2"], params["be2"])


if __name__ == "__main__":
    B, T, E = 2, 8, 32
    num_heads = 4
    ff_hidden_dim = 64

    key = jax.random.PRNGKey(0)
    k_x, k_p = jax.random.split(key)
    x = jax.random.normal(k_x, (B, T, E), jnp.float32)
    params = init_params(k_p, E, num_heads, ff_hidden_dim)

    out = transformer_encoder_block(x, params, num_heads)
    jax.block_until_ready(out)
    assert out.shape == (B, T, E) and out.dtype == jnp.float32

    ref = reference(x, params, num_heads)
    max_err = float(jnp.max(jnp.abs(out - ref)))
    # bf16 compute + approx reciprocal -> loose tolerance.
    assert max_err < 0.15, f"max abs err vs f32 reference: {max_err}"
    print("KERNEL_OK")
</pallas_src>

<mosaic_0001>
module attributes {stable_mosaic.version = 11 : i64} {
  func.func @encoder_block_kernel(%arg0: i32, %arg1: i32, %arg2: memref<1x8x32xbf16, #tpu.memory_space<vmem>>, %arg3: memref<32x96xbf16, #tpu.memory_space<vmem>>, %arg4: memref<1x96xf32, #tpu.memory_space<vmem>>, %arg5: memref<32x32xbf16, #tpu.memory_space<vmem>>, %arg6: memref<1x32xf32, #tpu.memory_space<vmem>>, %arg7: memref<1x32xf32, #tpu.memory_space<vmem>>, %arg8: memref<1x32xf32, #tpu.memory_space<vmem>>, %arg9: memref<32x64xbf16, #tpu.memory_space<vmem>>, %arg10: memref<1x64xf32, #tpu.memory_space<vmem>>, %arg11: memref<64x32xbf16, #tpu.memory_space<vmem>>, %arg12: memref<1x32xf32, #tpu.memory_space<vmem>>, %arg13: memref<1x32xf32, #tpu.memory_space<vmem>>, %arg14: memref<1x32xf32, #tpu.memory_space<vmem>>, %arg15: memref<1x8x32xf32, #tpu.memory_space<vmem>>, %arg16: memref<4x8x8xbf16, #tpu.memory_space<vmem>>, %arg17: memref<4x8x8xbf16, #tpu.memory_space<vmem>>, %arg18: memref<4x8x8xbf16, #tpu.memory_space<vmem>>, %arg19: memref<8x32xbf16, #tpu.memory_space<vmem>>) attributes {dimension_semantics = [#tpu.dimension_semantics<parallel>, #tpu.dimension_semantics<arbitrary>], iteration_bounds = array<i64: 2, 1>, scalar_prefetch = 0 : i64, scratch_operands = 4 : i64, tpu.core_type = #tpu.core_type<tc>, window_params = [{transform_indices = @transform_0, window_bounds = array<i64: 1, 8, 32>}, {pipeline_mode = #tpu.pipeline_mode<synchronous>, transform_indices = @transform_1, window_bounds = array<i64: 32, 96>}, {pipeline_mode = #tpu.pipeline_mode<synchronous>, transform_indices = @transform_2, window_bounds = array<i64: 1, 96>}, {pipeline_mode = #tpu.pipeline_mode<synchronous>, transform_indices = @transform_3, window_bounds = array<i64: 32, 32>}, {pipeline_mode = #tpu.pipeline_mode<synchronous>, transform_indices = @transform_4, window_bounds = array<i64: 1, 32>}, {pipeline_mode = #tpu.pipeline_mode<synchronous>, transform_indices = @transform_5, window_bounds = array<i64: 1, 32>}, {pipeline_mode = #tpu.pipeline_mode<synchronous>, transform_indices = @transform_6, window_bounds = array<i64: 1, 32>}, {pipeline_mode = #tpu.pipeline_mode<synchronous>, transform_indices = @transform_7, window_bounds = array<i64: 32, 64>}, {pipeline_mode = #tpu.pipeline_mode<synchronous>, transform_indices = @transform_8, window_bounds = array<i64: 1, 64>}, {pipeline_mode = #tpu.pipeline_mode<synchronous>, transform_indices = @transform_9, window_bounds = array<i64: 64, 32>}, {pipeline_mode = #tpu.pipeline_mode<synchronous>, transform_indices = @transform_10, window_bounds = array<i64: 1, 32>}, {pipeline_mode = #tpu.pipeline_mode<synchronous>, transform_indices = @transform_11, window_bounds = array<i64: 1, 32>}, {pipeline_mode = #tpu.pipeline_mode<synchronous>, transform_indices = @transform_12, window_bounds = array<i64: 1, 32>}, {transform_indices = @transform_13, window_bounds = array<i64: 1, 8, 32>}]} {
    %c0_i32 = arith.constant 0 : i32
    %0 = arith.cmpi eq, %arg1, %c0_i32 : i32
    %1 = arith.extui %0 : i1 to i32
    %c0_i32_0 = arith.constant 0 : i32
    %2 = arith.cmpi ne, %1, %c0_i32_0 : i32
    scf.if %2 {
      %c0_57 = arith.constant 0 : index
      %c0_58 = arith.constant 0 : index
      %c0_59 = arith.constant 0 : index
      %115 = vector.load %arg2[%c0_57, %c0_58, %c0_59] : memref<1x8x32xbf16, #tpu.memory_space<vmem>>, vector<1x8x32xbf16>
      %116 = vector.shape_cast %115 : vector<1x8x32xbf16> to vector<8x32xbf16>
      %c0_60 = arith.constant 0 : index
      %c0_61 = arith.constant 0 : index
      %117 = vector.load %arg3[%c0_60, %c0_61] : memref<32x96xbf16, #tpu.memory_space<vmem>>, vector<32x96xbf16>
      %cst_62 = arith.constant dense<0.000000e+00> : vector<8x96xf32>
      %118 = tpu.matmul %116, %117, %cst_62 {dimension_numbers = #tpu.dot_dimension_numbers<[1], [0], [0], [1], [0, 0, 1, 1], [], []>} : vector<8x32xbf16>, vector<32x96xbf16>, vector<8x96xf32> -> vector<8x96xf32>
      %c0_63 = arith.constant 0 : index
      %c0_64 = arith.constant 0 : index
      %119 = vector.load %arg4[%c0_63, %c0_64] : memref<1x96xf32, #tpu.memory_space<vmem>>, vector<1x96xf32>
      %120 = vector.broadcast %119 : vector<1x96xf32> to vector<8x96xf32>
      %121 = arith.addf %118, %120 : vector<8x96xf32>
      %122 = vector.extract_strided_slice %121 {offsets = [0, 0], sizes = [8, 8], strides = [1, 1]} : vector<8x96xf32> to vector<8x8xf32>
      %cst_65 = arith.constant 0.353553385 : f32
      %123 = vector.broadcast %cst_65 : f32 to vector<8x8xf32>
      %124 = arith.mulf %122, %123 : vector<8x8xf32>
      %125 = arith.truncf %124 : vector<8x8xf32> to vector<8x8xbf16>
      %c0_66 = arith.constant 0 : index
      %c0_67 = arith.constant 0 : index
      %c0_68 = arith.constant 0 : index
      %126 = vector.load %arg16[%c0_66, %c0_67, %c0_68] : memref<4x8x8xbf16, #tpu.memory_space<vmem>>, vector<1x8x8xbf16>
      %127 = vector.shape_cast %126 : vector<1x8x8xbf16> to vector<8x8xbf16>
      %128 = vector.shape_cast %125 : vector<8x8xbf16> to vector<1x8x8xbf16>
      tpu.vector_store %arg16[%c0_66, %c0_67, %c0_68], %128 {strides = array<i32>} : memref<4x8x8xbf16, #tpu.memory_space<vmem>>, vector<1x8x8xbf16>,
      %129 = vector.extract_strided_slice %121 {offsets = [0, 32], sizes = [8, 8], strides = [1, 1]} : vector<8x96xf32> to vector<8x8xf32>
      %130 = arith.truncf %129 : vector<8x8xf32> to vector<8x8xbf16>
      %c0_69 = arith.constant 0 : index
      %c0_70 = arith.constant 0 : index
      %c0_71 = arith.constant 0 : index
      %131 = vector.load %arg17[%c0_69, %c0_70, %c0_71] : memref<4x8x8xbf16, #tpu.memory_space<vmem>>, vector<1x8x8xbf16>
      %132 = vector.shape_cast %131 : vector<1x8x8xbf16> to vector<8x8xbf16>
      %133 = vector.shape_cast %130 : vector<8x8xbf16> to vector<1x8x8xbf16>
      tpu.vector_store %arg17[%c0_69, %c0_70, %c0_71], %133 {strides = array<i32>} : memref<4x8x8xbf16, #tpu.memory_space<vmem>>, vector<1x8x8xbf16>,
      %134 = vector.extract_strided_slice %121 {offsets = [0, 64], sizes = [8, 8], strides = [1, 1]} : vector<8x96xf32> to vector<8x8xf32>
      %135 = arith.truncf %134 : vector<8x8xf32> to vector<8x8xbf16>
      %c0_72 = arith.constant 0 : index
      %c0_73 = arith.constant 0 : index
      %c0_74 = arith.constant 0 : index
      %136 = vector.load %arg18[%c0_72, %c0_73, %c0_74] : memref<4x8x8xbf16, #tpu.memory_space<vmem>>, vector<1x8x8xbf16>
      %137 = vector.shape_cast %136 : vector<1x8x8xbf16> to vector<8x8xbf16>
      %138 = vector.shape_cast %135 : vector<8x8xbf16> to vector<1x8x8xbf16>
      tpu.vector_store %arg18[%c0_72, %c0_73, %c0_74], %138 {strides = array<i32>} : memref<4x8x8xbf16, #tpu.memory_space<vmem>>, vector<1x8x8xbf16>,
      %139 = vector.extract_strided_slice %121 {offsets = [0, 8], sizes = [8, 8], strides = [1, 1]} : vector<8x96xf32> to vector<8x8xf32>
      %cst_75 = arith.constant 0.353553385 : f32
      %140 = vector.broadcast %cst_75 : f32 to vector<8x8xf32>
      %141 = arith.mulf %139, %140 : vector<8x8xf32>
      %142 = arith.truncf %141 : vector<8x8xf32> to vector<8x8xbf16>
      %c1 = arith.constant 1 : index
      %c0_76 = arith.constant 0 : index
      %c0_77 = arith.constant 0 : index
      %143 = vector.load %arg16[%c1, %c0_76, %c0_77] : memref<4x8x8xbf16, #tpu.memory_space<vmem>>, vector<1x8x8xbf16>
      %144 = vector.shape_cast %143 : vector<1x8x8xbf16> to vector<8x8xbf16>
      %145 = vector.shape_cast %142 : vector<8x8xbf16> to vector<1x8x8xbf16>
      tpu.vector_store %arg16[%c1, %c0_76, %c0_77], %145 {strides = array<i32>} : memref<4x8x8xbf16, #tpu.memory_space<vmem>>, vector<1x8x8xbf16>,
      %146 = vector.extract_strided_slice %121 {offsets = [0, 40], sizes = [8, 8], strides = [1, 1]} : vector<8x96xf32> to vector<8x8xf32>
      %147 = arith.truncf %146 : vector<8x8xf32> to vector<8x8xbf16>
      %c1_78 = arith.constant 1 : index
      %c0_79 = arith.constant 0 : index
      %c0_80 = arith.constant 0 : index
      %148 = vector.load %arg17[%c1_78, %c0_79, %c0_80] : memref<4x8x8xbf16, #tpu.memory_space<vmem>>, vector<1x8x8xbf16>
      %149 = vector.shape_cast %148 : vector<1x8x8xbf16> to vector<8x8xbf16>
      %150 = vector.shape_cast %147 : vector<8x8xbf16> to vector<1x8x8xbf16>
      tpu.vector_store %arg17[%c1_78, %c0_79, %c0_80], %150 {strides = array<i32>} : memref<4x8x8xbf16, #tpu.memory_space<vmem>>, vector<1x8x8xbf16>,
      %151 = vector.extract_strided_slice %121 {offsets = [0, 72], sizes = [8, 8], strides = [1, 1]} : vector<8x96xf32> to vector<8x8xf32>
      %152 = arith.truncf %151 : vector<8x8xf32> to vector<8x8xbf16>
      %c1_81 = arith.constant 1 : index
      %c0_82 = arith.constant 0 : index
      %c0_83 = arith.constant 0 : index
      %153 = vector.load %arg18[%c1_81, %c0_82, %c0_83] : memref<4x8x8xbf16, #tpu.memory_space<vmem>>, vector<1x8x8xbf16>
      %154 = vector.shape_cast %153 : vector<1x8x8xbf16> to vector<8x8xbf16>
      %155 = vector.shape_cast %152 : vector<8x8xbf16> to vector<1x8x8xbf16>
      tpu.vector_store %arg18[%c1_81, %c0_82, %c0_83], %155 {strides = array<i32>} : memref<4x8x8xbf16, #tpu.memory_space<vmem>>, vector<1x8x8xbf16>,
      %156 = vector.extract_strided_slice %121 {offsets = [0, 16], sizes = [8, 8], strides = [1, 1]} : vector<8x96xf32> to vector<8x8xf32>
      %cst_84 = arith.constant 0.353553385 : f32
      %157 = vector.broadcast %cst_84 : f32 to vector<8x8xf32>
      %158 = arith.mulf %156, %157 : vector<8x8xf32>
      %159 = arith.truncf %158 : vector<8x8xf32> to vector<8x8xbf16>
      %c2 = arith.constant 2 : index
      %c0_85 = arith.constant 0 : index
      %c0_86 = arith.constant 0 : index
      %160 = vector.load %arg16[%c2, %c0_85, %c0_86] : memref<4x8x8xbf16, #tpu.memory_space<vmem>>, vector<1x8x8xbf16>
      %161 = vector.shape_cast %160 : vector<1x8x8xbf16> to vector<8x8xbf16>
      %162 = vector.shape_cast %159 : vector<8x8xbf16> to vector<1x8x8xbf16>
      tpu.vector_store %arg16[%c2, %c0_85, %c0_86], %162 {strides = array<i32>} : memref<4x8x8xbf16, #tpu.memory_space<vmem>>, vector<1x8x8xbf16>,
      %163 = vector.extract_strided_slice %121 {offsets = [0, 48], sizes = [8, 8], strides = [1, 1]} : vector<8x96xf32> to vector<8x8xf32>
      %164 = arith.truncf %163 : vector<8x8xf32> to vector<8x8xbf16>
      %c2_87 = arith.constant 2 : index
      %c0_88 = arith.constant 0 : index
      %c0_89 = arith.constant 0 : index
      %165 = vector.load %arg17[%c2_87, %c0_88, %c0_89] : memref<4x8x8xbf16, #tpu.memory_space<vmem>>, vector<1x8x8xbf16>
      %166 = vector.shape_cast %165 : vector<1x8x8xbf16> to vector<8x8xbf16>
      %167 = vector.shape_cast %164 : vector<8x8xbf16> to vector<1x8x8xbf16>
      tpu.vector_store %arg17[%c2_87, %c0_88, %c0_89], %167 {strides = array<i32>} : memref<4x8x8xbf16, #tpu.memory_space<vmem>>, vector<1x8x8xbf16>,
      %168 = vector.extract_strided_slice %121 {offsets = [0, 80], sizes = [8, 8], strides = [1, 1]} : vector<8x96xf32> to vector<8x8xf32>
      %169 = arith.truncf %168 : vector<8x8xf32> to vector<8x8xbf16>
      %c2_90 = arith.constant 2 : index
      %c0_91 = arith.constant 0 : index
      %c0_92 = arith.constant 0 : index
      %170 = vector.load %arg18[%c2_90, %c0_91, %c0_92] : memref<4x8x8xbf16, #tpu.memory_space<vmem>>, vector<1x8x8xbf16>
      %171 = vector.shape_cast %170 : vector<1x8x8xbf16> to vector<8x8xbf16>
      %172 = vector.shape_cast %169 : vector<8x8xbf16> to vector<1x8x8xbf16>
      tpu.vector_store %arg18[%c2_90, %c0_91, %c0_92], %172 {strides = array<i32>} : memref<4x8x8xbf16, #tpu.memory_space<vmem>>, vector<1x8x8xbf16>,
      %173 = vector.extract_strided_slice %121 {offsets = [0, 24], sizes = [8, 8], strides = [1, 1]} : vector<8x96xf32> to vector<8x8xf32>
      %cst_93 = arith.constant 0.353553385 : f32
      %174 = vector.broadcast %cst_93 : f32 to vector<8x8xf32>
      %175 = arith.mulf %173, %174 : vector<8x8xf32>
      %176 = arith.truncf %175 : vector<8x8xf32> to vector<8x8xbf16>
      %c3 = arith.constant 3 : index
      %c0_94 = arith.constant 0 : index
      %c0_95 = arith.constant 0 : index
      %177 = vector.load %arg16[%c3, %c0_94, %c0_95] : memref<4x8x8xbf16, #tpu.memory_space<vmem>>, vector<1x8x8xbf16>
      %178 = vector.shape_cast %177 : vector<1x8x8xbf16> to vector<8x8xbf16>
      %179 = vector.shape_cast %176 : vector<8x8xbf16> to vector<1x8x8xbf16>
      tpu.vector_store %arg16[%c3, %c0_94, %c0_95], %179 {strides = array<i32>} : memref<4x8x8xbf16, #tpu.memory_space<vmem>>, vector<1x8x8xbf16>,
      %180 = vector.extract_strided_slice %121 {offsets = [0, 56], sizes = [8, 8], strides = [1, 1]} : vector<8x96xf32> to vector<8x8xf32>
      %181 = arith.truncf %180 : vector<8x8xf32> to vector<8x8xbf16>
      %c3_96 = arith.constant 3 : index
      %c0_97 = arith.constant 0 : index
      %c0_98 = arith.constant 0 : index
      %182 = vector.load %arg17[%c3_96, %c0_97, %c0_98] : memref<4x8x8xbf16, #tpu.memory_space<vmem>>, vector<1x8x8xbf16>
      %183 = vector.shape_cast %182 : vector<1x8x8xbf16> to vector<8x8xbf16>
      %184 = vector.shape_cast %181 : vector<8x8xbf16> to vector<1x8x8xbf16>
      tpu.vector_store %arg17[%c3_96, %c0_97, %c0_98], %184 {strides = array<i32>} : memref<4x8x8xbf16, #tpu.memory_space<vmem>>, vector<1x8x8xbf16>,
      %185 = vector.extract_strided_slice %121 {offsets = [0, 88], sizes = [8, 8], strides = [1, 1]} : vector<8x96xf32> to vector<8x8xf32>
      %186 = arith.truncf %185 : vector<8x8xf32> to vector<8x8xbf16>
      %c3_99 = arith.constant 3 : index
      %c0_100 = arith.constant 0 : index
      %c0_101 = arith.constant 0 : index
      %187 = vector.load %arg18[%c3_99, %c0_100, %c0_101] : memref<4x8x8xbf16, #tpu.memory_space<vmem>>, vector<1x8x8xbf16>
      %188 = vector.shape_cast %187 : vector<1x8x8xbf16> to vector<8x8xbf16>
      %189 = vector.shape_cast %186 : vector<8x8xbf16> to vector<1x8x8xbf16>
      tpu.vector_store %arg18[%c3_99, %c0_100, %c0_101], %189 {strides = array<i32>} : memref<4x8x8xbf16, #tpu.memory_space<vmem>>, vector<1x8x8xbf16>,
    } else {
    }
    %c8_i32 = arith.constant 8 : i32
    %3 = arith.muli %arg1, %c8_i32 : i32
    %4 = tpu.assume_multiple %3, 8 : i32
    %c0 = arith.constant 0 : index
    %5 = arith.index_cast %4 : i32 to index
    %c0_1 = arith.constant 0 : index
    %6 = vector.load %arg16[%c0, %5, %c0_1] : memref<4x8x8xbf16, #tpu.memory_space<vmem>>, vector<4x8x8xbf16>
    %c0_2 = arith.constant 0 : index
    %c0_3 = arith.constant 0 : index
    %c0_4 = arith.constant 0 : index
    %7 = vector.load %arg17[%c0_2, %c0_3, %c0_4] : memref<4x8x8xbf16, #tpu.memory_space<vmem>>, vector<4x8x8xbf16>
    "tpu.trace_start"() <{level = 10 : i32, message = "hqd,hkd->hqk"}> : () -> ()
    %cst = arith.constant dense<0.000000e+00> : vector<4x8x8xf32>
    %8 = tpu.matmul %6, %7, %cst {dimension_numbers = #tpu.dot_dimension_numbers<[2], [2], [1], [1], [0, 0, 0, 1, 1, 1], [0], [0]>} : vector<4x8x8xbf16>, vector<4x8x8xbf16>, vector<4x8x8xf32> -> vector<4x8x8xf32>
    "tpu.trace_stop"() : () -> ()
    %cst_5 = arith.constant dense<0xFF800000> : vector<4x8xf32>
    %9 = vector.multi_reduction <maximumf>, %8, %cst_5 [2] : vector<4x8x8xf32> to vector<4x8xf32>
    %10 = vector.shape_cast %9 : vector<4x8xf32> to vector<4x8x1xf32>
    %11 = vector.broadcast %10 : vector<4x8x1xf32> to vector<4x8x8xf32>
    %12 = arith.subf %8, %11 : vector<4x8x8xf32>
    %13 = math.exp %12 : vector<4x8x8xf32>
    %cst_6 = arith.constant dense<0.000000e+00> : vector<4x8xf32>
    %14 = vector.multi_reduction <add>, %13, %cst_6 [2] : vector<4x8x8xf32> to vector<4x8xf32>
    %15 = vector.shape_cast %14 : vector<4x8xf32> to vector<4x8x1xf32>
    %16 = tpu.reciprocal %15 {approx = true} : vector<4x8x1xf32> -> vector<4x8x1xf32>
    %17 = vector.broadcast %16 : vector<4x8x1xf32> to vector<4x8x8xf32>
    %18 = arith.mulf %13, %17 : vector<4x8x8xf32>
    %19 = arith.truncf %18 : vector<4x8x8xf32> to vector<4x8x8xbf16>
    %c0_7 = arith.constant 0 : index
    %c0_8 = arith.constant 0 : index
    %c0_9 = arith.constant 0 : index
    %20 = vector.load %arg18[%c0_7, %c0_8, %c0_9] : memref<4x8x8xbf16, #tpu.memory_space<vmem>>, vector<4x8x8xbf16>
    "tpu.trace_start"() <{level = 10 : i32, message = "hqk,hkd->hqd"}> : () -> ()
    %cst_10 = arith.constant dense<0.000000e+00> : vector<4x8x8xf32>
    %21 = tpu.matmul %19, %20, %cst_10 {dimension_numbers = #tpu.dot_dimension_numbers<[2], [1], [1], [2], [0, 0, 0, 1, 1, 2], [0], [0]>} : vector<4x8x8xbf16>, vector<4x8x8xbf16>, vector<4x8x8xf32> -> vector<4x8x8xf32>
    "tpu.trace_stop"() : () -> ()
    %22 = vector.extract_strided_slice %21 {offsets = [0, 0, 0], sizes = [1, 8, 8], strides = [1, 1, 1]} : vector<4x8x8xf32> to vector<1x8x8xf32>
    %23 = vector.shape_cast %22 : vector<1x8x8xf32> to vector<8x8xf32>
    %24 = arith.truncf %23 : vector<8x8xf32> to vector<8x8xbf16>
    %c0_11 = arith.constant 0 : index
    %c0_12 = arith.constant 0 : index
    %25 = vector.load %arg19[%c0_11, %c0_12] : memref<8x32xbf16, #tpu.memory_space<vmem>>, vector<8x8xbf16>
    tpu.vector_store %arg19[%c0_11, %c0_12], %24 {strides = array<i32>} : memref<8x32xbf16, #tpu.memory_space<vmem>>, vector<8x8xbf16>,
    %26 = vector.extract_strided_slice %21 {offsets = [1, 0, 0], sizes = [1, 8, 8], strides = [1, 1, 1]} : vector<4x8x8xf32> to vector<1x8x8xf32>
    %27 = vector.shape_cast %26 : vector<1x8x8xf32> to vector<8x8xf32>
    %28 = arith.truncf %27 : vector<8x8xf32> to vector<8x8xbf16>
    %c0_13 = arith.constant 0 : index
    %c8 = arith.constant 8 : index
    %29 = vector.load %arg19[%c0_13, %c8] : memref<8x32xbf16, #tpu.memory_space<vmem>>, vector<8x8xbf16>
    tpu.vector_store %arg19[%c0_13, %c8], %28 {strides = array<i32>} : memref<8x32xbf16, #tpu.memory_space<vmem>>, vector<8x8xbf16>,
    %30 = vector.extract_strided_slice %21 {offsets = [2, 0, 0], sizes = [1, 8, 8], strides = [1, 1, 1]} : vector<4x8x8xf32> to vector<1x8x8xf32>
    %31 = vector.shape_cast %30 : vector<1x8x8xf32> to vector<8x8xf32>
    %32 = arith.truncf %31 : vector<8x8xf32> to vector<8x8xbf16>
    %c0_14 = arith.constant 0 : index
    %c16 = arith.constant 16 : index
    %33 = vector.load %arg19[%c0_14, %c16] : memref<8x32xbf16, #tpu.memory_space<vmem>>, vector<8x8xbf16>
    tpu.vector_store %arg19[%c0_14, %c16], %32 {strides = array<i32>} : memref<8x32xbf16, #tpu.memory_space<vmem>>, vector<8x8xbf16>,
    %34 = vector.extract_strided_slice %21 {offsets = [3, 0, 0], sizes = [1, 8, 8], strides = [1, 1, 1]} : vector<4x8x8xf32> to vector<1x8x8xf32>
    %35 = vector.shape_cast %34 : vector<1x8x8xf32> to vector<8x8xf32>
    %36 = arith.truncf %35 : vector<8x8xf32> to vector<8x8xbf16>
    %c0_15 = arith.constant 0 : index
    %c24 = arith.constant 24 : index
    %37 = vector.load %arg19[%c0_15, %c24] : memref<8x32xbf16, #tpu.memory_space<vmem>>, vector<8x8xbf16>
    tpu.vector_store %arg19[%c0_15, %c24], %36 {strides = array<i32>} : memref<8x32xbf16, #tpu.memory_space<vmem>>, vector<8x8xbf16>,
    %c0_16 = arith.constant 0 : index
    %c0_17 = arith.constant 0 : index
    %38 = vector.load %arg19[%c0_16, %c0_17] : memref<8x32xbf16, #tpu.memory_space<vmem>>, vector<8x32xbf16>
    %c0_18 = arith.constant 0 : index
    %c0_19 = arith.constant 0 : index
    %39 = vector.load %arg5[%c0_18, %c0_19] : memref<32x32xbf16, #tpu.memory_space<vmem>>, vector<32x32xbf16>
    %cst_20 = arith.constant dense<0.000000e+00> : vector<8x32xf32>
    %40 = tpu.matmul %38, %39, %cst_20 {dimension_numbers = #tpu.dot_dimension_numbers<[1], [0], [0], [1], [0, 0, 1, 1], [], []>} : vector<8x32xbf16>, vector<32x32xbf16>, vector<8x32xf32> -> vector<8x32xf32>
    %c0_21 = arith.constant 0 : index
    %c0_22 = arith.constant 0 : index
    %41 = vector.load %arg6[%c0_21, %c0_22] : memref<1x32xf32, #tpu.memory_space<vmem>>, vector<1x32xf32>
    %42 = vector.broadcast %41 : vector<1x32xf32> to vector<8x32xf32>
    %43 = arith.addf %40, %42 : vector<8x32xf32>
    %c0_23 = arith.constant 0 : index
    %44 = arith.index_cast %4 : i32 to index
    %c0_24 = arith.constant 0 : index
    %45 = vector.load %arg2[%c0_23, %44, %c0_24] : memref<1x8x32xbf16, #tpu.memory_space<vmem>>, vector<1x8x32xbf16>
    %46 = vector.shape_cast %45 : vector<1x8x32xbf16> to vector<8x32xbf16>
    %47 = arith.extf %46 : vector<8x32xbf16> to vector<8x32xf32>
    %48 = arith.addf %47, %43 : vector<8x32xf32>
    %c0_25 = arith.constant 0 : index
    %c0_26 = arith.constant 0 : index
    %49 = vector.load %arg7[%c0_25, %c0_26] : memref<1x32xf32, #tpu.memory_space<vmem>>, vector<1x32xf32>
    %c0_27 = arith.constant 0 : index
    %c0_28 = arith.constant 0 : index
    %50 = vector.load %arg8[%c0_27, %c0_28] : memref<1x32xf32, #tpu.memory_space<vmem>>, vector<1x32xf32>
    %cst_29 = arith.constant dense<0.000000e+00> : vector<8xf32>
    %51 = vector.multi_reduction <add>, %48, %cst_29 [1] : vector<8x32xf32> to vector<8xf32>
    %52 = vector.shape_cast %51 : vector<8xf32> to vector<8x1xf32>
    %cst_30 = arith.constant 3.200000e+01 : f32
    %53 = vector.broadcast %cst_30 : f32 to vector<8x1xf32>
    %54 = arith.divf %52, %53 : vector<8x1xf32>
    %55 = vector.broadcast %54 : vector<8x1xf32> to vector<8x32xf32>
    %56 = arith.subf %48, %55 : vector<8x32xf32>
    %57 = arith.mulf %56, %56 : vector<8x32xf32>
    %cst_31 = arith.constant dense<0.000000e+00> : vector<8xf32>
    %58 = vector.multi_reduction <add>, %57, %cst_31 [1] : vector<8x32xf32> to vector<8xf32>
    %59 = vector.shape_cast %58 : vector<8xf32> to vector<8x1xf32>
    %cst_32 = arith.constant 3.200000e+01 : f32
    %60 = vector.broadcast %cst_32 : f32 to vector<8x1xf32>
    %61 = arith.divf %59, %60 : vector<8x1xf32>
    %62 = vector.broadcast %54 : vector<8x1xf32> to vector<8x32xf32>
    %63 = arith.subf %48, %62 : vector<8x32xf32>
    %cst_33 = arith.constant 9.99999974E-6 : f32
    %64 = vector.broadcast %cst_33 : f32 to vector<8x1xf32>
    %65 = arith.addf %61, %64 : vector<8x1xf32>
    %66 = math.rsqrt %65 : vector<8x1xf32>
    %67 = vector.broadcast %66 : vector<8x1xf32> to vector<8x32xf32>
    %68 = arith.mulf %63, %67 : vector<8x32xf32>
    %69 = vector.broadcast %49 : vector<1x32xf32> to vector<8x32xf32>
    %70 = arith.mulf %68, %69 : vector<8x32xf32>
    %71 = vector.broadcast %50 : vector<1x32xf32> to vector<8x32xf32>
    %72 = arith.addf %70, %71 : vector<8x32xf32>
    %73 = arith.truncf %72 : vector<8x32xf32> to vector<8x32xbf16>
    %c0_34 = arith.constant 0 : index
    %c0_35 = arith.constant 0 : index
    %74 = vector.load %arg9[%c0_34, %c0_35] : memref<32x64xbf16, #tpu.memory_space<vmem>>, vector<32x64xbf16>
    %cst_36 = arith.constant dense<0.000000e+00> : vector<8x64xf32>
    %75 = tpu.matmul %73, %74, %cst_36 {dimension_numbers = #tpu.dot_dimension_numbers<[1], [0], [0], [1], [0, 0, 1, 1], [], []>} : vector<8x32xbf16>, vector<32x64xbf16>, vector<8x64xf32> -> vector<8x64xf32>
    %c0_37 = arith.constant 0 : index
    %c0_38 = arith.constant 0 : index
    %76 = vector.load %arg10[%c0_37, %c0_38] : memref<1x64xf32, #tpu.memory_space<vmem>>, vector<1x64xf32>
    %77 = vector.broadcast %76 : vector<1x64xf32> to vector<8x64xf32>
    %78 = arith.addf %75, %77 : vector<8x64xf32>
    %cst_39 = arith.constant 0.000000e+00 : f32
    %79 = vector.broadcast %cst_39 : f32 to vector<8x64xf32>
    %80 = arith.maximumf %78, %79 : vector<8x64xf32>
    %81 = arith.truncf %80 : vector<8x64xf32> to vector<8x64xbf16>
    %c0_40 = arith.constant 0 : index
    %c0_41 = arith.constant 0 : index
    %82 = vector.load %arg11[%c0_40, %c0_41] : memref<64x32xbf16, #tpu.memory_space<vmem>>, vector<64x32xbf16>
    %cst_42 = arith.constant dense<0.000000e+00> : vector<8x32xf32>
    %83 = tpu.matmul %81, %82, %cst_42 {dimension_numbers = #tpu.dot_dimension_numbers<[1], [0], [0], [1], [0, 0, 1, 1], [], []>} : vector<8x64xbf16>, vector<64x32xbf16>, vector<8x32xf32> -> vector<8x32xf32>
    %c0_43 = arith.constant 0 : index
    %c0_44 = arith.constant 0 : index
    %84 = vector.load %arg12[%c0_43, %c0_44] : memref<1x32xf32, #tpu.memory_space<vmem>>, vector<1x32xf32>
    %85 = vector.broadcast %84 : vector<1x32xf32> to vector<8x32xf32>
    %86 = arith.addf %83, %85 : vector<8x32xf32>
    %87 = arith.addf %72, %86 : vector<8x32xf32>
    %c0_45 = arith.constant 0 : index
    %c0_46 = arith.constant 0 : index
    %88 = vector.load %arg13[%c0_45, %c0_46] : memref<1x32xf32, #tpu.memory_space<vmem>>, vector<1x32xf32>
    %c0_47 = arith.constant 0 : index
    %c0_48 = arith.constant 0 : index
    %89 = vector.load %arg14[%c0_47, %c0_48] : memref<1x32xf32, #tpu.memory_space<vmem>>, vector<1x32xf32>
    %cst_49 = arith.constant dense<0.000000e+00> : vector<8xf32>
    %90 = vector.multi_reduction <add>, %87, %cst_49 [1] : vector<8x32xf32> to vector<8xf32>
    %91 = vector.shape_cast %90 : vector<8xf32> to vector<8x1xf32>
    %cst_50 = arith.constant 3.200000e+01 : f32
    %92 = vector.broadcast %cst_50 : f32 to vector<8x1xf32>
    %93 = arith.divf %91, %92 : vector<8x1xf32>
    %94 = vector.broadcast %93 : vector<8x1xf32> to vector<8x32xf32>
    %95 = arith.subf %87, %94 : vector<8x32xf32>
    %96 = arith.mulf %95, %95 : vector<8x32xf32>
    %cst_51 = arith.constant dense<0.000000e+00> : vector<8xf32>
    %97 = vector.multi_reduction <add>, %96, %cst_51 [1] : vector<8x32xf32> to vector<8xf32>
    %98 = vector.shape_cast %97 : vector<8xf32> to vector<8x1xf32>
    %cst_52 = arith.constant 3.200000e+01 : f32
    %99 = vector.broadcast %cst_52 : f32 to vector<8x1xf32>
    %100 = arith.divf %98, %99 : vector<8x1xf32>
    %101 = vector.broadcast %93 : vector<8x1xf32> to vector<8x32xf32>
    %102 = arith.subf %87, %101 : vector<8x32xf32>
    %cst_53 = arith.constant 9.99999974E-6 : f32
    %103 = vector.broadcast %cst_53 : f32 to vector<8x1xf32>
    %104 = arith.addf %100, %103 : vector<8x1xf32>
    %105 = math.rsqrt %104 : vector<8x1xf32>
    %106 = vector.broadcast %105 : vector<8x1xf32> to vector<8x32xf32>
    %107 = arith.mulf %102, %106 : vector<8x32xf32>
    %108 = vector.broadcast %88 : vector<1x32xf32> to vector<8x32xf32>
    %109 = arith.mulf %107, %108 : vector<8x32xf32>
    %110 = vector.broadcast %89 : vector<1x32xf32> to vector<8x32xf32>
    %111 = arith.addf %109, %110 : vector<8x32xf32>
    %c0_54 = arith.constant 0 : index
    %c0_55 = arith.constant 0 : index
    %c0_56 = arith.constant 0 : index
    %112 = vector.load %arg15[%c0_54, %c0_55, %c0_56] : memref<1x8x32xf32, #tpu.memory_space<vmem>>, vector<1x8x32xf32>
    %113 = vector.shape_cast %112 : vector<1x8x32xf32> to vector<8x32xf32>
    %114 = vector.shape_cast %111 : vector<8x32xf32> to vector<1x8x32xf32>
    tpu.vector_store %arg15[%c0_54, %c0_55, %c0_56], %114 {strides = array<i32>} : memref<1x8x32xf32, #tpu.memory_space<vmem>>, vector<1x8x32xf32>,
    return
  }
  func.func @transform_0(%arg0: i32, %arg1: i32) -> (i32, i32, i32) {
    %c0_i32 = arith.constant 0 : i32
    %c0_i32_0 = arith.constant 0 : i32
    %c0_i32_1 = arith.constant 0 : i32
    return %arg0, %c0_i32, %c0_i32_0 : i32, i32, i32
  }
  func.func @transform_1(%arg0: i32, %arg1: i32) -> (i32, i32) {
    %c0_i32 = arith.constant 0 : i32
    %c0_i32_0 = arith.constant 0 : i32
    %c0_i32_1 = arith.constant 0 : i32
    return %c0_i32, %c0_i32_0 : i32, i32
  }
  func.func @transform_2(%arg0: i32, %arg1: i32) -> (i32, i32) {
    %c0_i32 = arith.constant 0 : i32
    %c0_i32_0 = arith.constant 0 : i32
    %c0_i32_1 = arith.constant 0 : i32
    return %c0_i32, %c0_i32_0 : i32, i32
  }
  func.func @transform_3(%arg0: i32, %arg1: i32) -> (i32, i32) {
    %c0_i32 = arith.constant 0 : i32
    %c0_i32_0 = arith.constant 0 : i32
    %c0_i32_1 = arith.constant 0 : i32
    return %c0_i32, %c0_i32_0 : i32, i32
  }
  func.func @transform_4(%arg0: i32, %arg1: i32) -> (i32, i32) {
    %c0_i32 = arith.constant 0 : i32
    %c0_i32_0 = arith.constant 0 : i32
    %c0_i32_1 = arith.constant 0 : i32
    return %c0_i32, %c0_i32_0 : i32, i32
  }
  func.func @transform_5(%arg0: i32, %arg1: i32) -> (i32, i32) {
    %c0_i32 = arith.constant 0 : i32
    %c0_i32_0 = arith.constant 0 : i32
    %c0_i32_1 = arith.constant 0 : i32
    return %c0_i32, %c0_i32_0 : i32, i32
  }
  func.func @transform_6(%arg0: i32, %arg1: i32) -> (i32, i32) {
    %c0_i32 = arith.constant 0 : i32
    %c0_i32_0 = arith.constant 0 : i32
    %c0_i32_1 = arith.constant 0 : i32
    return %c0_i32, %c0_i32_0 : i32, i32
  }
  func.func @transform_7(%arg0: i32, %arg1: i32) -> (i32, i32) {
    %c0_i32 = arith.constant 0 : i32
    %c0_i32_0 = arith.constant 0 : i32
    %c0_i32_1 = arith.constant 0 : i32
    return %c0_i32, %c0_i32_0 : i32, i32
  }
  func.func @transform_8(%arg0: i32, %arg1: i32) -> (i32, i32) {
    %c0_i32 = arith.constant 0 : i32
    %c0_i32_0 = arith.constant 0 : i32
    %c0_i32_1 = arith.constant 0 : i32
    return %c0_i32, %c0_i32_0 : i32, i32
  }
  func.func @transform_9(%arg0: i32, %arg1: i32) -> (i32, i32) {
    %c0_i32 = arith.constant 0 : i32
    %c0_i32_0 = arith.constant 0 : i32
    %c0_i32_1 = arith.constant 0 : i32
    return %c0_i32, %c0_i32_0 : i32, i32
  }
  func.func @transform_10(%arg0: i32, %arg1: i32) -> (i32, i32) {
    %c0_i32 = arith.constant 0 : i32
    %c0_i32_0 = arith.constant 0 : i32
    %c0_i32_1 = arith.constant 0 : i32
    return %c0_i32, %c0_i32_0 : i32, i32
  }
  func.func @transform_11(%arg0: i32, %arg1: i32) -> (i32, i32) {
    %c0_i32 = arith.constant 0 : i32
    %c0_i32_0 = arith.constant 0 : i32
    %c0_i32_1 = arith.constant 0 : i32
    return %c0_i32, %c0_i32_0 : i32, i32
  }
  func.func @transform_12(%arg0: i32, %arg1: i32) -> (i32, i32) {
    %c0_i32 = arith.constant 0 : i32
    %c0_i32_0 = arith.constant 0 : i32
    %c0_i32_1 = arith.constant 0 : i32
    return %c0_i32, %c0_i32_0 : i32, i32
  }
  func.func @transform_13(%arg0: i32, %arg1: i32) -> (i32, i32, i32) {
    %c0_i32 = arith.constant 0 : i32
    %c0_i32_0 = arith.constant 0 : i32
    return %arg0, %arg1, %c0_i32 : i32, i32, i32
  }
}

</mosaic_0001>

<llo_original>
// kernel: tpu_custom_call.1
$region0: #{tpu_custom_call.1}
  #allocation0 [shape = 'u32[]', space=smem, size = 0x4, offset = 0x4, fixed_abs, tag = 'smem constant byte address 0x4 - core index']
  #allocation1 [shape = 'u32[72,128]{1,0:T(1,128)}', space=vmem, size = 0x9000, scoped, tag = 'internal scratch']
  #allocation2 [shape = 'bf16[4,8,8]{2,1,0:T(8,128)(2,1)}', space=vmem, size = 0x2000, scoped, tag = 'scratch operand']
  #allocation3 [shape = 'bf16[4,8,8]{2,1,0:T(8,128)(2,1)}', space=vmem, size = 0x2000, scoped, tag = 'scratch operand']
  #allocation4 [shape = 'bf16[4,8,8]{2,1,0:T(8,128)(2,1)}', space=vmem, size = 0x2000, scoped, tag = 'scratch operand']
  #allocation5 [shape = 'bf16[8,32]{1,0:T(8,128)(2,1)}', space=vmem, size = 0x800, scoped, tag = 'scratch operand']
  %s0 = inlined_call_operand.hbm [shape: bf16[2,8,32], index: 0, kind: input, shape index: {}]
  %s1 = inlined_call_operand.vmem [shape: bf16[32,96], index: 1, kind: input, shape index: {}]
  %s2 = inlined_call_operand.vmem [shape: f32[1,96], index: 2, kind: input, shape index: {}]
  %s3 = inlined_call_operand.vmem [shape: bf16[32,32], index: 3, kind: input, shape index: {}]
  %s4 = inlined_call_operand.vmem [shape: f32[1,32], index: 4, kind: input, shape index: {}]
  %s5 = inlined_call_operand.vmem [shape: f32[1,32], index: 5, kind: input, shape index: {}]
  %s6 = inlined_call_operand.vmem [shape: f32[1,32], index: 6, kind: input, shape index: {}]
  %s7 = inlined_call_operand.vmem [shape: bf16[32,64], index: 7, kind: input, shape index: {}]
  %s8 = inlined_call_operand.vmem [shape: f32[1,64], index: 8, kind: input, shape index: {}]
  %s9 = inlined_call_operand.vmem [shape: bf16[64,32], index: 9, kind: input, shape index: {}]
  %s10 = inlined_call_operand.vmem [shape: f32[1,32], index: 10, kind: input, shape index: {}]
  %s11 = inlined_call_operand.vmem [shape: f32[1,32], index: 11, kind: input, shape index: {}]
  %s12 = inlined_call_operand.vmem [shape: f32[1,32], index: 12, kind: input, shape index: {}]
  %s13 = inlined_call_operand.hbm [shape: f32[2,8,32], index: 13, kind: output, shape index: {}]
  %s14 = sld [smem:[#allocation0]]
  $region93: #{tpu_custom_call.1} parent=0
    _
  %s16 = ssub.s32 1, %s14
  %s17 = scalar_select 0, %s16, %s14
  $region1: #{tpu_custom_call.1} parent=0
    #allocation6 [shape = 'u8[4096]{0}', space=vmem, size = 0x1000, scoped, tag = 'input window, operand 0']
    #allocation7 [shape = 's32[2]{0}', space=sflag, size = 0x8, scoped, tag = 'scoped memory for tpu_custom_call.1']
    #allocation8 [shape = 's32[2]{0}', space=sflag, size = 0x8, scoped, tag = 'scoped memory for tpu_custom_call.1']
    #allocation9 [shape = 'u8[8192]{0}', space=vmem, size = 0x2000, scoped, tag = 'output window, operand 0']
    %18 = vsyncpa [#allocation7], 0
    %s19 = scalar_lea.sflag [#allocation7], 1
    %20 = vsyncpa %s19, 0
    %21 = vsyncpa [#allocation8], 0
    %s22 = scalar_lea.sflag [#allocation8], 1
    %23 = vsyncpa %s22, 0
    loop: start=0, step=1, limit=4
    $region2: #{tpu_custom_call.1} parent=1 // loop_pre_header
      _
    $region3: #{tpu_custom_call.1} parent=1 // loop_header
      %s25 = sphi 0, %s29
      %p26 = scmp.ge.s32.totalorder %s25, 4
      %s32 = sphi 0, %s44
      %s33 = sphi 0, %s40
      %s34 = sphi 0, %s32
      %s35 = sphi 0, %s33
      %s36 = sphi 0, %s34
      %s37 = sphi 0, %s35
      %s47 = sphi 0, %s49
      %s50 = sphi 0, %s47
      %s51 = sphi 0, %s50
      %s67 = sphi 0, %s51
      %s71 = sphi 0, %s71
      %s73 = sphi 0, %s71
      %s74 = sphi 0, %s73
      %s88 = sphi 0, %s74
      %s92 = sphi 0, %s92
      %s94 = sphi 0, %s92
      %s95 = sphi 0, %s94
      %s109 = sphi 0, %s95
      %s113 = sphi 0, %s113
      %s115 = sphi 0, %s113
      %s116 = sphi 0, %s115
      %s130 = sphi 0, %s116
      %s134 = sphi 0, %s134
      %s136 = sphi 0, %s134
      %s137 = sphi 0, %s136
      %s151 = sphi 0, %s137
      %s155 = sphi 0, %s155
      %s157 = sphi 0, %s155
      %s158 = sphi 0, %s157
      %s172 = sphi 0, %s158
      %s176 = sphi 0, %s176
      %s178 = sphi 0, %s176
      %s179 = sphi 0, %s178
      %s193 = sphi 0, %s179
      %s197 = sphi 0, %s197
      %s199 = sphi 0, %s197
      %s200 = sphi 0, %s199
      %s214 = sphi 0, %s200
      %s218 = sphi 0, %s218
      %s220 = sphi 0, %s218
      %s221 = sphi 0, %s220
      %s235 = sphi 0, %s221
      %s239 = sphi 0, %s239
      %s241 = sphi 0, %s239
      %s242 = sphi 0, %s241
      %s256 = sphi 0, %s242
      %s260 = sphi 0, %s260
      %s262 = sphi 0, %s260
      %s263 = sphi 0, %s262
      %s277 = sphi 0, %s263
      %s281 = sphi 0, %s281
      %s283 = sphi 0, %s281
      %s284 = sphi 0, %s283
      %s298 = sphi 0, %s284
      %s302 = sphi 0, %s302
      %s304 = sphi 0, %s302
      %s305 = sphi 0, %s304
      %s319 = sphi 0, %s305
      %s327 = sphi 0, %s329
      %s330 = sphi 0, %s327
      %s331 = sphi 0, %s330
      %s347 = sphi 0, %s331
    $region4: #{tpu_custom_call.1} parent=1 // loop_header_branch
      %28 = sbr.rel (%p26) target = $region8
    $region5: #{tpu_custom_call.1} parent=1 // loop_body
      %s30 = ssub.s32 %s25, 1
      %s31 = ssub.s32 %s25, 2
      %s38 = sadd.s32 1, %s33
      %p39 = scmp.ge.s32.totalorder %s38, 1
      %s40 = scalar_select %p39, 0, %s38
      %s41 = sadd.s32 1, %s32
      %s42 = scalar_select %p39, %s41, %s32
      %p43 = scmp.ge.s32.totalorder %s42, 2
      %s44 = scalar_select %p43, 0, %s42
      %s45 = ssub.s32 %s32, %s44
      %p46 = scmp.eq.s32.totalorder %s45, 0
      %s48 = sadd.s32 %s47, 1
      %s49 = scalar_select %p46, %s47, %s48
      %p52 = pneg %p46
      %p53 = scmp.eq.s32.totalorder %s25, 1
      %p54 = por %p52, %p53
      %p55 = scmp.ne.s32.totalorder %s47, %s50
      %p56 = scmp.eq.s32.totalorder %s25, 0
      %p57 = por %p55, %p56
      %p58 = scmp.ne.s32.totalorder %s47, %s50
      %p59 = scmp.eq.s32.totalorder %s30, 1
      %p60 = por %p58, %p59
      %p61 = scmp.ne.s32.totalorder %s50, %s51
      %p62 = scmp.eq.s32.totalorder %s30, 0
      %p63 = por %p61, %p62
      %p64 = scmp.ne.s32.totalorder %s50, %s51
      %p65 = scmp.eq.s32.totalorder %s31, 1
      %p66 = por %p64, %p65
      %p68 = scmp.ne.s32.totalorder %s51, %s67
      %p69 = scmp.eq.s32.totalorder %s31, 0
      %p70 = por %p68, %p69
      %s72 = sadd.s32 %s71, 1
      %p75 = scmp.eq.s32.totalorder %s25, 1
      %p76 = scmp.ne.s32.totalorder %s71, %s73
      %p77 = scmp.eq.s32.totalorder %s25, 0
      %p78 = por %p76, %p77
      %p79 = scmp.ne.s32.totalorder %s71, %s73
      %p80 = scmp.eq.s32.totalorder %s30, 1
      %p81 = por %p79, %p80
      %p82 = scmp.ne.s32.totalorder %s73, %s74
      %p83 = scmp.eq.s32.totalorder %s30, 0
      %p84 = por %p82, %p83
      %p85 = scmp.ne.s32.totalorder %s73, %s74
      %p86 = scmp.eq.s32.totalorder %s31, 1
      %p87 = por %p85, %p86
      %p89 = scmp.ne.s32.totalorder %s74, %s88
      %p90 = scmp.eq.s32.totalorder %s31, 0
      %p91 = por %p89, %p90
      %s93 = sadd.s32 %s92, 1
      %p96 = scmp.eq.s32.totalorder %s25, 1
      %p97 = scmp.ne.s32.totalorder %s92, %s94
      %p98 = scmp.eq.s32.totalorder %s25, 0
      %p99 = por %p97, %p98
      %p100 = scmp.ne.s32.totalorder %s92, %s94
      %p101 = scmp.eq.s32.totalorder %s30, 1
      %p102 = por %p100, %p101
      %p103 = scmp.ne.s32.totalorder %s94, %s95
      %p104 = scmp.eq.s32.totalorder %s30, 0
      %p105 = por %p103, %p104
      %p106 = scmp.ne.s32.totalorder %s94, %s95
      %p107 = scmp.eq.s32.totalorder %s31, 1
      %p108 = por %p106, %p107
      %p110 = scmp.ne.s32.totalorder %s95, %s109
      %p111 = scmp.eq.s32.totalorder %s31, 0
      %p112 = por %p110, %p111
      %s114 = sadd.s32 %s113, 1
      %p117 = scmp.eq.s32.totalorder %s25, 1
      %p118 = scmp.ne.s32.totalorder %s113, %s115
      %p119 = scmp.eq.s32.totalorder %s25, 0
      %p120 = por %p118, %p119
      %p121 = scmp.ne.s32.totalorder %s113, %s115
      %p122 = scmp.eq.s32.totalorder %s30, 1
      %p123 = por %p121, %p122
      %p124 = scmp.ne.s32.totalorder %s115, %s116
      %p125 = scmp.eq.s32.totalorder %s30, 0
      %p126 = por %p124, %p125
      %p127 = scmp.ne.s32.totalorder %s115, %s116
      %p128 = scmp.eq.s32.totalorder %s31, 1
      %p129 = por %p127, %p128
      %p131 = scmp.ne.s32.totalorder %s116, %s130
      %p132 = scmp.eq.s32.totalorder %s31, 0
      %p133 = por %p131, %p132
      %s135 = sadd.s32 %s134, 1
      %p138 = scmp.eq.s32.totalorder %s25, 1
      %p139 = scmp.ne.s32.totalorder %s134, %s136
      %p140 = scmp.eq.s32.totalorder %s25, 0
      %p141 = por %p139, %p140
      %p142 = scmp.ne.s32.totalorder %s134, %s136
      %p143 = scmp.eq.s32.totalorder %s30, 1
      %p144 = por %p142, %p143
      %p145 = scmp.ne.s32.totalorder %s136, %s137
      %p146 = scmp.eq.s32.totalorder %s30, 0
      %p147 = por %p145, %p146
      %p148 = scmp.ne.s32.totalorder %s136, %s137
      %p149 = scmp.eq.s32.totalorder %s31, 1
      %p150 = por %p148, %p149
      %p152 = scmp.ne.s32.totalorder %s137, %s151
      %p153 = scmp.eq.s32.totalorder %s31, 0
      %p154 = por %p152, %p153
      %s156 = sadd.s32 %s155, 1
      %p159 = scmp.eq.s32.totalorder %s25, 1
      %p160 = scmp.ne.s32.totalorder %s155, %s157
      %p161 = scmp.eq.s32.totalorder %s25, 0
      %p162 = por %p160, %p161
      %p163 = scmp.ne.s32.totalorder %s155, %s157
      %p164 = scmp.eq.s32.totalorder %s30, 1
      %p165 = por %p163, %p164
      %p166 = scmp.ne.s32.totalorder %s157, %s158
      %p167 = scmp.eq.s32.totalorder %s30, 0
      %p168 = por %p166, %p167
      %p169 = scmp.ne.s32.totalorder %s157, %s158
      %p170 = scmp.eq.s32.totalorder %s31, 1
      %p171 = por %p169, %p170
      %p173 = scmp.ne.s32.totalorder %s158, %s172
      %p174 = scmp.eq.s32.totalorder %s31, 0
      %p175 = por %p173, %p174
      %s177 = sadd.s32 %s176, 1
      %p180 = scmp.eq.s32.totalorder %s25, 1
      %p181 = scmp.ne.s32.totalorder %s176, %s178
      %p182 = scmp.eq.s32.totalorder %s25, 0
      %p183 = por %p181, %p182
      %p184 = scmp.ne.s32.totalorder %s176, %s178
      %p185 = scmp.eq.s32.totalorder %s30, 1
      %p186 = por %p184, %p185
      %p187 = scmp.ne.s32.totalorder %s178, %s179
      %p188 = scmp.eq.s32.totalorder %s30, 0
      %p189 = por %p187, %p188
      %p190 = scmp.ne.s32.totalorder %s178, %s179
      %p191 = scmp.eq.s32.totalorder %s31, 1
      %p192 = por %p190, %p191
      %p194 = scmp.ne.s32.totalorder %s179, %s193
      %p195 = scmp.eq.s32.totalorder %s31, 0
      %p196 = por %p194, %p195
      %s198 = sadd.s32 %s197, 1
      %p201 = scmp.eq.s32.totalorder %s25, 1
      %p202 = scmp.ne.s32.totalorder %s197, %s199
      %p203 = scmp.eq.s32.totalorder %s25, 0
      %p204 = por %p202, %p203
      %p205 = scmp.ne.s32.totalorder %s197, %s199
      %p206 = scmp.eq.s32.totalorder %s30, 1
      %p207 = por %p205, %p206
      %p208 = scmp.ne.s32.totalorder %s199, %s200
      %p209 = scmp.eq.s32.totalorder %s30, 0
      %p210 = por %p208, %p209
      %p211 = scmp.ne.s32.totalorder %s199, %s200
      %p212 = scmp.eq.s32.totalorder %s31, 1
      %p213 = por %p211, %p212
      %p215 = scmp.ne.s32.totalorder %s200, %s214
      %p216 = scmp.eq.s32.totalorder %s31, 0
      %p217 = por %p215, %p216
      %s219 = sadd.s32 %s218, 1
      %p222 = scmp.eq.s32.totalorder %s25, 1
      %p223 = scmp.ne.s32.totalorder %s218, %s220
      %p224 = scmp.eq.s32.totalorder %s25, 0
      %p225 = por %p223, %p224
      %p226 = scmp.ne.s32.totalorder %s218, %s220
      %p227 = scmp.eq.s32.totalorder %s30, 1
      %p228 = por %p226, %p227
      %p229 = scmp.ne.s32.totalorder %s220, %s221
      %p230 = scmp.eq.s32.totalorder %s30, 0
      %p231 = por %p229, %p230
      %p232 = scmp.ne.s32.totalorder %s220, %s221
      %p233 = scmp.eq.s32.totalorder %s31, 1
      %p234 = por %p232, %p233
      %p236 = scmp.ne.s32.totalorder %s221, %s235
      %p237 = scmp.eq.s32.totalorder %s31, 0
      %p238 = por %p236, %p237
      %s240 = sadd.s32 %s239, 1
      %p243 = scmp.eq.s32.totalorder %s25, 1
      %p244 = scmp.ne.s32.totalorder %s239, %s241
      %p245 = scmp.eq.s32.totalorder %s25, 0
      %p246 = por %p244, %p245
      %p247 = scmp.ne.s32.totalorder %s239, %s241
      %p248 = scmp.eq.s32.totalorder %s30, 1
      %p249 = por %p247, %p248
      %p250 = scmp.ne.s32.totalorder %s241, %s242
      %p251 = scmp.eq.s32.totalorder %s30, 0
      %p252 = por %p250, %p251
      %p253 = scmp.ne.s32.totalorder %s241, %s242
      %p254 = scmp.eq.s32.totalorder %s31, 1
      %p255 = por %p253, %p254
      %p257 = scmp.ne.s32.totalorder %s242, %s256
      %p258 = scmp.eq.s32.totalorder %s31, 0
      %p259 = por %p257, %p258
      %s261 = sadd.s32 %s260, 1
      %p264 = scmp.eq.s32.totalorder %s25, 1
      %p265 = scmp.ne.s32.totalorder %s260, %s262
      %p266 = scmp.eq.s32.totalorder %s25, 0
      %p267 = por %p265, %p266
      %p268 = scmp.ne.s32.totalorder %s260, %s262
      %p269 = scmp.eq.s32.totalorder %s30, 1
      %p270 = por %p268, %p269
      %p271 = scmp.ne.s32.totalorder %s262, %s263
      %p272 = scmp.eq.s32.totalorder %s30, 0
      %p273 = por %p271, %p272
      %p274 = scmp.ne.s32.totalorder %s262, %s263
      %p275 = scmp.eq.s32.totalorder %s31, 1
      %p276 = por %p274, %p275
      %p278 = scmp.ne.s32.totalorder %s263, %s277
      %p279 = scmp.eq.s32.totalorder %s31, 0
      %p280 = por %p278, %p279
      %s282 = sadd.s32 %s281, 1
      %p285 = scmp.eq.s32.totalorder %s25, 1
      %p286 = scmp.ne.s32.totalorder %s281, %s283
      %p287 = scmp.eq.s32.totalorder %s25, 0
      %p288 = por %p286, %p287
      %p289 = scmp.ne.s32.totalorder %s281, %s283
      %p290 = scmp.eq.s32.totalorder %s30, 1
      %p291 = por %p289, %p290
      %p292 = scmp.ne.s32.totalorder %s283, %s284
      %p293 = scmp.eq.s32.totalorder %s30, 0
      %p294 = por %p292, %p293
      %p295 = scmp.ne.s32.totalorder %s283, %s284
      %p296 = scmp.eq.s32.totalorder %s31, 1
      %p297 = por %p295, %p296
      %p299 = scmp.ne.s32.totalorder %s284, %s298
      %p300 = scmp.eq.s32.totalorder %s31, 0
      %p301 = por %p299, %p300
      %s303 = sadd.s32 %s302, 1
      %p306 = scmp.eq.s32.totalorder %s25, 1
      %p307 = scmp.ne.s32.totalorder %s302, %s304
      %p308 = scmp.eq.s32.totalorder %s25, 0
      %p309 = por %p307, %p308
      %p310 = scmp.ne.s32.totalorder %s302, %s304
      %p311 = scmp.eq.s32.totalorder %s30, 1
      %p312 = por %p310, %p311
      %p313 = scmp.ne.s32.totalorder %s304, %s305
      %p314 = scmp.eq.s32.totalorder %s30, 0
      %p315 = por %p313, %p314
      %p316 = scmp.ne.s32.totalorder %s304, %s305
      %p317 = scmp.eq.s32.totalorder %s31, 1
      %p318 = por %p316, %p317
      %p320 = scmp.ne.s32.totalorder %s305, %s319
      %p321 = scmp.eq.s32.totalorder %s31, 0
      %p322 = por %p320, %p321
      %s323 = ssub.s32 %s32, %s44
      %s324 = ssub.s32 %s33, %s40
      %s325 = sor.u32 %s323, %s324
      %p326 = scmp.eq.s32.totalorder %s325, 0
      %s328 = sadd.s32 %s327, 1
      %s329 = scalar_select %p326, %s327, %s328
      %p332 = pneg %p326
      %p333 = scmp.eq.s32.totalorder %s25, 1
      %p334 = por %p332, %p333
      %p335 = scmp.ne.s32.totalorder %s327, %s330
      %p336 = scmp.eq.s32.totalorder %s25, 0
      %p337 = por %p335, %p336
      %p338 = scmp.ne.s32.totalorder %s327, %s330
      %p339 = scmp.eq.s32.totalorder %s30, 1
      %p340 = por %p338, %p339
      %p341 = scmp.ne.s32.totalorder %s330, %s331
      %p342 = scmp.eq.s32.totalorder %s30, 0
      %p343 = por %p341, %p342
      %p344 = scmp.ne.s32.totalorder %s330, %s331
      %p345 = scmp.eq.s32.totalorder %s31, 1
      %p346 = por %p344, %p345
      %p348 = scmp.ne.s32.totalorder %s331, %s347
      %p349 = scmp.eq.s32.totalorder %s31, 0
      %p350 = por %p348, %p349
      %p351 = scmp.le.s32.totalorder 1, %s25
      %p352 = scmp.lt.s32.totalorder %s25, 3
      %p353 = pnand %p351, %p352
      %p354 = pneg %p353
      // Predicated region
      $region9: #{tpu_custom_call.1} parent=5 // pred_check
        _
      $region10: #{tpu_custom_call.1} parent=5 // pred_check_branch
        %356 = sbr.rel (%p353) target = $region12
      $region11: #{tpu_custom_call.1} parent=5 // pred_region
        %s357 = ssub.s32 %s25, 1
        // Predicated region
        $region13: #{tpu_custom_call.1} parent=11 // pred_check
          %p358 = pneg %p84
        $region14: #{tpu_custom_call.1} parent=11 // pred_check_branch
          %360 = sbr.rel (%p358) target = $region16
        $region15: #{tpu_custom_call.1} parent=11 // pred_region
          _
        $region16: #{tpu_custom_call.1} parent=11 // pred_fallthru
          _
        // Predicated region
        $region17: #{tpu_custom_call.1} parent=11 // pred_check
          %p361 = pneg %p105
        $region18: #{tpu_custom_call.1} parent=11 // pred_check_branch
          %363 = sbr.rel (%p361) target = $region20
        $region19: #{tpu_custom_call.1} parent=11 // pred_region
          _
        $region20: #{tpu_custom_call.1} parent=11 // pred_fallthru
          _
        // Predicated region
        $region21: #{tpu_custom_call.1} parent=11 // pred_check
          %p364 = pneg %p126
        $region22: #{tpu_custom_call.1} parent=11 // pred_check_branch
          %366 = sbr.rel (%p364) target = $region24
        $region23: #{tpu_custom_call.1} parent=11 // pred_region
          _
        $region24: #{tpu_custom_call.1} parent=11 // pred_fallthru
          _
        // Predicated region
        $region25: #{tpu_custom_call.1} parent=11 // pred_check
          %p367 = pneg %p147
        $region26: #{tpu_custom_call.1} parent=11 // pred_check_branch
          %369 = sbr.rel (%p367) target = $region28
        $region27: #{tpu_custom_call.1} parent=11 // pred_region
          _
        $region28: #{tpu_custom_call.1} parent=11 // pred_fallthru
          _
        // Predicated region
        $region29: #{tpu_custom_call.1} parent=11 // pred_check
          %p370 = pneg %p168
        $region30: #{tpu_custom_call.1} parent=11 // pred_check_branch
          %372 = sbr.rel (%p370) target = $region32
        $region31: #{tpu_custom_call.1} parent=11 // pred_region
          _
        $region32: #{tpu_custom_call.1} parent=11 // pred_fallthru
          _
        // Predicated region
        $region33: #{tpu_custom_call.1} parent=11 // pred_check
          %p373 = pneg %p189
        $region34: #{tpu_custom_call.1} parent=11 // pred_check_branch
          %375 = sbr.rel (%p373) target = $region36
        $region35: #{tpu_custom_call.1} parent=11 // pred_region
          _
        $region36: #{tpu_custom_call.1} parent=11 // pred_fallthru
          _
        // Predicated region
        $region37: #{tpu_custom_call.1} parent=11 // pred_check
          %p376 = pneg %p210
        $region38: #{tpu_custom_call.1} parent=11 // pred_check_branch
          %378 = sbr.rel (%p376) target = $region40
        $region39: #{tpu_custom_call.1} parent=11 // pred_region
          _
        $region40: #{tpu_custom_call.1} parent=11 // pred_fallthru
          _
        // Predicated region
        $region41: #{tpu_custom_call.1} parent=11 // pred_check
          %p379 = pneg %p231
        $region42: #{tpu_custom_call.1} parent=11 // pred_check_branch
          %381 = sbr.rel (%p379) target = $region44
        $region43: #{tpu_custom_call.1} parent=11 // pred_region
          _
        $region44: #{tpu_custom_call.1} parent=11 // pred_fallthru
          _
        // Predicated region
        $region45: #{tpu_custom_call.1} parent=11 // pred_check
          %p382 = pneg %p252
        $region46: #{tpu_custom_call.1} parent=11 // pred_check_branch
          %384 = sbr.rel (%p382) target = $region48
        $region47: #{tpu_custom_call.1} parent=11 // pred_region
          _
        $region48: #{tpu_custom_call.1} parent=11 // pred_fallthru
          _
        // Predicated region
        $region49: #{tpu_custom_call.1} parent=11 // pred_check
          %p385 = pneg %p273
        $region50: #{tpu_custom_call.1} parent=11 // pred_check_branch
          %387 = sbr.rel (%p385) target = $region52
        $region51: #{tpu_custom_call.1} parent=11 // pred_region
          _
        $region52: #{tpu_custom_call.1} parent=11 // pred_fallthru
          _
        // Predicated region
        $region53: #{tpu_custom_call.1} parent=11 // pred_check
          %p388 = pneg %p294
        $region54: #{tpu_custom_call.1} parent=11 // pred_check_branch
          %390 = sbr.rel (%p388) target = $region56
        $region55: #{tpu_custom_call.1} parent=11 // pred_region
          _
        $region56: #{tpu_custom_call.1} parent=11 // pred_fallthru
          _
        // Predicated region
        $region57: #{tpu_custom_call.1} parent=11 // pred_check
          %p391 = pneg %p315
        $region58: #{tpu_custom_call.1} parent=11 // pred_check_branch
          %393 = sbr.rel (%p391) target = $region60
        $region59: #{tpu_custom_call.1} parent=11 // pred_region
          _
        $region60: #{tpu_custom_call.1} parent=11 // pred_fallthru
          _
      $region12: #{tpu_custom_call.1} parent=5 // pred_fallthru
        _
      %p394 = scmp.lt.s32.totalorder %s25, 2
      // Predicated region
      $region61: #{tpu_custom_call.1} parent=5 // pred_check
        %p395 = pneg %p394
      $region62: #{tpu_custom_call.1} parent=5 // pred_check_branch
        %397 = sbr.rel (%p395) target = $region64
      $region63: #{tpu_custom_call.1} parent=5 // pred_region
        // Predicated region
        $region65: #{tpu_custom_call.1} parent=63 // pred_check
          %p398 = pneg %p57
        $region66: #{tpu_custom_call.1} parent=63 // pred_check_branch
          %400 = sbr.rel (%p398) target = $region68
        $region67: #{tpu_custom_call.1} parent=63 // pred_region
          %s401 = sand.u32 %s47, 1
          %s402 = scalar_lea.sflag [#allocation7], %s401
          %s403 = sand.u32 %s47, 1
          %s404 = smul.addr %s403, 4
          %s405 = scalar_lea.vmem [#allocation6], %s404
          %407 = vsyncadd %s402, 0
          %s408 = smul.addr %s32, 4
          %s409 = scalar_lea.hbm %s0, %s408
          %s411 = sshll.u32 %s409, 4
          %s412 = int_to_ptr.hbm [resolvable:$true] %s411
          %s413 = sshll.u32 %s405, 4
          %s414 = int_to_ptr.vmem [resolvable:$true] %s413
          %416 = dma.hbm_to_vmem [thread:$0]  %s412, 64, %s414, %s402
        $region68: #{tpu_custom_call.1} parent=63 // pred_fallthru
          _
      $region64: #{tpu_custom_call.1} parent=5 // pred_fallthru
        _
      %p417 = scmp.le.s32.totalorder 1, %s25
      %p418 = scmp.lt.s32.totalorder %s25, 3
      %p419 = pnand %p417, %p418
      %p420 = pneg %p419
      // Predicated region
      $region69: #{tpu_custom_call.1} parent=5 // pred_check
        _
      $region70: #{tpu_custom_call.1} parent=5 // pred_check_branch
        %422 = sbr.rel (%p419) target = $region72
      $region71: #{tpu_custom_call.1} parent=5 // pred_region
        %s423 = ssub.s32 %s25, 1
        %s424 = sand.u32 %s50, 1
        %s425 = scalar_lea.sflag [#allocation7], %s424
        %s426 = sand.u32 %s50, 1
        %s427 = smul.addr %s426, 4
        %s428 = scalar_lea.vmem [#allocation6], %s427
        // Predicated region
        $region73: #{tpu_custom_call.1} parent=71 // pred_check
          %p429 = pneg %p63
        $region74: #{tpu_custom_call.1} parent=71 // pred_check_branch
          %431 = sbr.rel (%p429) target = $region76
        $region75: #{tpu_custom_call.1} parent=71 // pred_region
          %433 = dma.done %s425, 64
        $region76: #{tpu_custom_call.1} parent=71 // pred_fallthru
          _
        %s434 = sand.u32 %s50, 1
        %s435 = scalar_lea.sflag [#allocation7], %s434
        %s436 = sand.u32 %s50, 1
        %s437 = smul.addr %s436, 4
        %s438 = scalar_lea.vmem [#allocation6], %s437
        %p439 = pneg %p63
        %p440 = pneg %p60
        %p441 = pneg %p84
        %p442 = pneg %p81
        %p443 = pneg %p105
        %p444 = pneg %p102
        %p445 = pneg %p126
        %p446 = pneg %p123
        %p447 = pneg %p147
        %p448 = pneg %p144
        %p449 = pneg %p168
        %p450 = pneg %p165
        %p451 = pneg %p189
        %p452 = pneg %p186
        %p453 = pneg %p210
        %p454 = pneg %p207
        %p455 = pneg %p231
        %p456 = pneg %p228
        %p457 = pneg %p252
        %p458 = pneg %p249
        %p459 = pneg %p273
        %p460 = pneg %p270
        %p461 = pneg %p294
        %p462 = pneg %p291
        %p463 = pneg %p315
        %p464 = pneg %p312
        %p465 = pneg %p343
        %p466 = pneg %p340
        %s467 = sand.u32 %s330, 1
        %s468 = scalar_lea.sflag [#allocation8], %s467
        %s469 = sand.u32 %s330, 1
        %s470 = smul.addr %s469, 8
        %s471 = scalar_lea.vmem [#allocation9], %s470
        %p473 = scmp.eq.s32.totalorder %s35, 0
        // Predicated region
        $region77: #{tpu_custom_call.1} parent=71 // pred_check
          %p474 = pneg %p473
        $region78: #{tpu_custom_call.1} parent=71 // pred_check_branch
          %476 = sbr.rel (%p474) target = $region80
        $region79: #{tpu_custom_call.1} parent=71 // pred_region
          %v477 = vld [vmem:[%s428] sm:$0xf]
          %v478 = vld [vmem:[%s1] sm:$0xf]
          %v479 = vld [vmem:[%s1 + $0x4] sm:$0xf]
          %v480 = vld [vmem:[%s1 + $0x8] sm:$0xf]
          %v481 = vld [vmem:[%s1 + $0xc] sm:$0xf]
          %v482 = vld [vmem:[%s2] sm:$0x1]
          %v484 = vperm.slane %v482, 0
          %v490 = vunpack.c.l.b16 %v478
          %v491 = vunpack.c.l.b16 %v479
          %v492 = vunpack.c.l.b16 %v480
          %v493 = vunpack.c.l.b16 %v481
          %v494 = vpack.c.b16 %v491, %v490
          %v495 = vpack.c.b16 %v493, %v492
          %vm498 = vcmask 261120
          %v500 = vsel %vm498, %v477, 0
          %502 = vmatpush.bf16.msra.mxu0 0
          %503 = vmatpush.bf16.msra.mxu0 0
          %504 = vmatpush.bf16.msra.mxu0 0
          %505 = vmatpush.bf16.msra.mxu0 0
          %506 = vmatpush.bf16.msra.mxu0 0
          %507 = vmatpush.bf16.msra.mxu0 0
          %508 = vmatpush.bf16.msra.mxu0 %v495
          %509 = vmatpush.bf16.msra.mxu0 %v494
          %510 = vmatmul.bf16.gmra.mxu0 %v500
          %v511 = vpop.f32.mrf.mxu0
          %v512 = vadd.f32 %v484, %v511
          %v513 = vpop.f32.mrf.mxu0
          %514 = vdwg.mxu0
          %v515 = vmul.f32 %v512, 0.35355338
          %v516 = vpack.c.bf16 %v515, %v515
          %vm517 = vcmask 60416
          %518 = vst.msk [vmem:[#allocation2] sm:$0xf] %vm517, %v516
          %v519 = vpack.c.bf16 %v512, %v512
          %521 = vrot.lane.b32.xlu0 %v519, 96
          %v522 = vpop.permute.xlu0 %521
          %524 = vst.msk [vmem:[#allocation3] sm:$0xf] %vm517, %v522
          %525 = vrot.lane.b32.xlu0 %v519, 64
          %v526 = vpop.permute.xlu0 %525
          %528 = vst.msk [vmem:[#allocation4] sm:$0xf] %vm517, %v526
          %530 = vrot.lane.b32.xlu0 %v516, 120
          %v531 = vpop.permute.xlu0 %530
          %s533 = scalar_lea.vmem [#allocation2], 4
          %534 = vst.msk [vmem:[%s533] sm:$0xf] %vm517, %v531
          %535 = vrot.lane.b32.xlu0 %v519, 88
          %v536 = vpop.permute.xlu0 %535
          %s538 = scalar_lea.vmem [#allocation3], 4
          %539 = vst.msk [vmem:[%s538] sm:$0xf] %vm517, %v536
          %540 = vrot.lane.b32.xlu0 %v519, 56
          %v541 = vpop.permute.xlu0 %540
          %s543 = scalar_lea.vmem [#allocation4], 4
          %544 = vst.msk [vmem:[%s543] sm:$0xf] %vm517, %v541
          %545 = vrot.lane.b32.xlu0 %v516, 112
          %v546 = vpop.permute.xlu0 %545
          %s548 = scalar_lea.vmem [#allocation2], 8
          %549 = vst.msk [vmem:[%s548] sm:$0xf] %vm517, %v546
          %550 = vrot.lane.b32.xlu0 %v519, 80
          %v551 = vpop.permute.xlu0 %550
          %s553 = scalar_lea.vmem [#allocation3], 8
          %554 = vst.msk [vmem:[%s553] sm:$0xf] %vm517, %v551
          %555 = vrot.lane.b32.xlu0 %v519, 48
          %v556 = vpop.permute.xlu0 %555
          %s558 = scalar_lea.vmem [#allocation4], 8
          %559 = vst.msk [vmem:[%s558] sm:$0xf] %vm517, %v556
          %560 = vrot.lane.b32.xlu0 %v516, 104
          %v561 = vpop.permute.xlu0 %560
          %s563 = scalar_lea.vmem [#allocation2], 12
          %564 = vst.msk [vmem:[%s563] sm:$0xf] %vm517, %v561
          %565 = vrot.lane.b32.xlu0 %v519, 72
          %v566 = vpop.permute.xlu0 %565
          %s568 = scalar_lea.vmem [#allocation3], 12
          %569 = vst.msk [vmem:[%s568] sm:$0xf] %vm517, %v566
          %570 = vrot.lane.b32.xlu0 %v519, 40
          %v571 = vpop.permute.xlu0 %570
          %s573 = scalar_lea.vmem [#allocation4], 12
          %574 = vst.msk [vmem:[%s573] sm:$0xf] %vm517, %v571
        $region80: #{tpu_custom_call.1} parent=71 // pred_fallthru
          _
        %s575 = smul.u32 %s35, 8
        %s576 = sshra.s32 %s575, 3
        %s577 = sand.u32 %s575, 7
        %s578 = smul.addr %s576, 4
        %s579 = scalar_lea.vmem [#allocation2], %s578
        %v580 = vld [vmem:[%s579] sm:$0xf]
        %v581 = vld [vmem:[%s579 + $0x4] sm:$0xf]
        %v582 = vld [vmem:[%s579 + $0x8] sm:$0xf]
        %v583 = vld [vmem:[%s579 + $0xc] sm:$0xf]
        %v584 = vld [vmem:[#allocation3] sm:$0xf]
        %v585 = vld [vmem:[#allocation3 + $0x4] sm:$0xf]
        %v586 = vld [vmem:[#allocation3 + $0x8] sm:$0xf]
        %v587 = vld [vmem:[#allocation3 + $0xc] sm:$0xf]
        %vm588 = vcmask 64512
        %v590 = vsel %vm588, %v580, 0
        %v593 = vsel %vm588, %v584, 0
        %595 = vmatpush.bf16.xpose.msra.mxu0 0
        %596 = vmatpush.bf16.xpose.msra.mxu0 0
        %597 = vmatpush.bf16.xpose.msra.mxu0 0
        %598 = vmatpush.bf16.xpose.msra.mxu0 0
        %599 = vmatpush.bf16.xpose.msra.mxu0 0
        %600 = vmatpush.bf16.xpose.msra.mxu0 0
        %601 = vmatpush.bf16.xpose.msra.mxu0 0
        %602 = vmatpush.bf16.xpose.msra.mxu0 %v593
        %603 = vmatmul.bf16.gmra.mxu0 %v590
        %v604 = vpop.f32.mrf.mxu0
        %v605 = vadd.f32 0.0, %v604
        %v606 = vpop.f32.mrf.mxu0
        %607 = vdwg.mxu0
        %v609 = vsel %vm588, %v581, 0
        %v612 = vsel %vm588, %v585, 0
        %614 = vmatpush.bf16.xpose.msra.mxu0 0
        %615 = vmatpush.bf16.xpose.msra.mxu0 0
        %616 = vmatpush.bf16.xpose.msra.mxu0 0
        %617 = vmatpush.bf16.xpose.msra.mxu0 0
        %618 = vmatpush.bf16.xpose.msra.mxu0 0
        %619 = vmatpush.bf16.xpose.msra.mxu0 0
        %620 = vmatpush.bf16.xpose.msra.mxu0 0
        %621 = vmatpush.bf16.xpose.msra.mxu0 %v612
        %622 = vmatmul.bf16.gmra.mxu0 %v609
        %v623 = vpop.f32.mrf.mxu0
        %v624 = vadd.f32 0.0, %v623
        %v625 = vpop.f32.mrf.mxu0
        %626 = vdwg.mxu0
        %v628 = vsel %vm588, %v582, 0
        %v631 = vsel %vm588, %v586, 0
        %633 = vmatpush.bf16.xpose.msra.mxu0 0
        %634 = vmatpush.bf16.xpose.msra.mxu0 0
        %635 = vmatpush.bf16.xpose.msra.mxu0 0
        %636 = vmatpush.bf16.xpose.msra.mxu0 0
        %637 = vmatpush.bf16.xpose.msra.mxu0 0
        %638 = vmatpush.bf16.xpose.msra.mxu0 0
        %639 = vmatpush.bf16.xpose.msra.mxu0 0
        %640 = vmatpush.bf16.xpose.msra.mxu0 %v631
        %641 = vmatmul.bf16.gmra.mxu0 %v628
        %v642 = vpop.f32.mrf.mxu0
        %v643 = vadd.f32 0.0, %v642
        %v644 = vpop.f32.mrf.mxu0
        %645 = vdwg.mxu0
        %v647 = vsel %vm588, %v583, 0
        %v650 = vsel %vm588, %v587, 0
        %652 = vmatpush.bf16.xpose.msra.mxu0 0
        %653 = vmatpush.bf16.xpose.msra.mxu0 0
        %654 = vmatpush.bf16.xpose.msra.mxu0 0
        %655 = vmatpush.bf16.xpose.msra.mxu0 0
        %656 = vmatpush.bf16.xpose.msra.mxu0 0
        %657 = vmatpush.bf16.xpose.msra.mxu0 0
        %658 = vmatpush.bf16.xpose.msra.mxu0 0
        %659 = vmatpush.bf16.xpose.msra.mxu0 %v650
        %660 = vmatmul.bf16.gmra.mxu0 %v647
        %v661 = vpop.f32.mrf.mxu0
        %v662 = vadd.f32 0.0, %v661
        %v663 = vpop.f32.mrf.mxu0
        %664 = vdwg.mxu0
        %v665 = vsel %vm588, %v605, -inf
        %666 = vmax.xlane.f32.xlu0 %v665
        %v667 = vpop.xlane.xlu0 %666
        %v668 = vsel %vm588, %v624, -inf
        %669 = vmax.xlane.f32.xlu0 %v668
        %v670 = vpop.xlane.xlu0 %669
        %v671 = vsel %vm588, %v643, -inf
        %672 = vmax.xlane.f32.xlu0 %v671
        %v673 = vpop.xlane.xlu0 %672
        %v674 = vsel %vm588, %v662, -inf
        %675 = vmax.xlane.f32.xlu0 %v674
        %v676 = vpop.xlane.xlu0 %675
        %v677 = vsub.f32 %v605, %v667
        %v678 = vsub.f32 %v624, %v670
        %v679 = vsub.f32 %v643, %v673
        %v680 = vsub.f32 %v662, %v676
        %v681 = vmul.f32 %v677, 1.442695
        %v682 = vpow.pop %v681
        %v683 = vmul.f32 %v678, 1.442695
        %v684 = vpow.pop %v683
        %v685 = vmul.f32 %v679, 1.442695
        %v686 = vpow.pop %v685
        %v687 = vmul.f32 %v680, 1.442695
        %v688 = vpow.pop %v687
        %v689 = vsel %vm588, %v682, 0.0
        %690 = vadd.xlane.f32.xlu0 %v689
        %v691 = vpop.xlane.xlu0 %690
        %v692 = vsel %vm588, %v684, 0.0
        %693 = vadd.xlane.f32.xlu0 %v692
        %v694 = vpop.xlane.xlu0 %693
        %v695 = vsel %vm588, %v686, 0.0
        %696 = vadd.xlane.f32.xlu0 %v695
        %v697 = vpop.xlane.xlu0 %696
        %v698 = vsel %vm588, %v688, 0.0
        %699 = vadd.xlane.f32.xlu0 %v698
        %v700 = vpop.xlane.xlu0 %699
        %v701 = vrcp.pop %v691
        %v702 = vrcp.pop %v694
        %v703 = vrcp.pop %v697
        %v704 = vrcp.pop %v700
        %v705 = vmul.f32 %v682, %v701
        %v706 = vmul.f32 %v684, %v702
        %v707 = vmul.f32 %v686, %v703
        %v708 = vmul.f32 %v688, %v704
        %v709 = vpack.c.bf16 %v705, %v705
        %v710 = vpack.c.bf16 %v706, %v706
        %v711 = vpack.c.bf16 %v707, %v707
        %v712 = vpack.c.bf16 %v708, %v708
        %v713 = vld [vmem:[#allocation4] sm:$0xf]
        %v714 = vld [vmem:[#allocation4 + $0x4] sm:$0xf]
        %v715 = vld [vmem:[#allocation4 + $0x8] sm:$0xf]
        %v716 = vld [vmem:[#allocation4 + $0xc] sm:$0xf]
        %v718 = vsel %vm588, %v709, 0
        %vm720 = vcmask 1043456
        %v722 = vsel %vm720, %v713, 0
        %724 = vmatpush.bf16.msra.mxu0 0
        %725 = vmatpush.bf16.msra.mxu0 0
        %726 = vmatpush.bf16.msra.mxu0 0
        %727 = vmatpush.bf16.msra.mxu0 0
        %728 = vmatpush.bf16.msra.mxu0 0
        %729 = vmatpush.bf16.msra.mxu0 0
        %730 = vmatpush.bf16.msra.mxu0 0
        %731 = vmatpush.bf16.msra.mxu0 %v722
        %732 = vmatmul.bf16.gmra.mxu0 %v718
        %v733 = vpop.f32.mrf.mxu0
        %v734 = vadd.f32 0.0, %v733
        %v735 = vpop.f32.mrf.mxu0
        %736 = vdwg.mxu0
        %v738 = vsel %vm588, %v710, 0
        %v741 = vsel %vm720, %v714, 0
        %743 = vmatpush.bf16.msra.mxu0 0
        %744 = vmatpush.bf16.msra.mxu0 0
        %745 = vmatpush.bf16.msra.mxu0 0
        %746 = vmatpush.bf16.msra.mxu0 0
        %747 = vmatpush.bf16.msra.mxu0 0
        %748 = vmatpush.bf16.msra.mxu0 0
        %749 = vmatpush.bf16.msra.mxu0 0
        %750 = vmatpush.bf16.msra.mxu0 %v741
        %751 = vmatmul.bf16.gmra.mxu0 %v738
        %v752 = vpop.f32.mrf.mxu0
        %v753 = vadd.f32 0.0, %v752
        %v754 = vpop.f32.mrf.mxu0
        %755 = vdwg.mxu0
        %v757 = vsel %vm588, %v711, 0
        %v760 = vsel %vm720, %v715, 0
        %762 = vmatpush.bf16.msra.mxu0 0
        %763 = vmatpush.bf16.msra.mxu0 0
        %764 = vmatpush.bf16.msra.mxu0 0
        %765 = vmatpush.bf16.msra.mxu0 0
        %766 = vmatpush.bf16.msra.mxu0 0
        %767 = vmatpush.bf16.msra.mxu0 0
        %768 = vmatpush.bf16.msra.mxu0 0
        %769 = vmatpush.bf16.msra.mxu0 %v760
        %770 = vmatmul.bf16.gmra.mxu0 %v757
        %v771 = vpop.f32.mrf.mxu0
        %v772 = vadd.f32 0.0, %v771
        %v773 = vpop.f32.mrf.mxu0
        %774 = vdwg.mxu0
        %v776 = vsel %vm588, %v712, 0
        %v779 = vsel %vm720, %v716, 0
        %781 = vmatpush.bf16.msra.mxu0 0
        %782 = vmatpush.bf16.msra.mxu0 0
        %783 = vmatpush.bf16.msra.mxu0 0
        %784 = vmatpush.bf16.msra.mxu0 0
        %785 = vmatpush.bf16.msra.mxu0 0
        %786 = vmatpush.bf16.msra.mxu0 0
        %787 = vmatpush.bf16.msra.mxu0 0
        %788 = vmatpush.bf16.msra.mxu0 %v779
        %789 = vmatmul.bf16.gmra.mxu0 %v776
        %v790 = vpop.f32.mrf.mxu0
        %v791 = vadd.f32 0.0, %v790
        %v792 = vpop.f32.mrf.mxu0
        %793 = vdwg.mxu0
        %v794 = vpack.c.bf16 %v734, %v734
        %vm795 = vcmask 60416
        %796 = vst.msk [vmem:[#allocation5] sm:$0xf] %vm795, %v794
        %v797 = vpack.c.bf16 %v753, %v753
        %799 = vrot.lane.b32.xlu0 %v797, 8
        %v800 = vpop.permute.xlu0 %799
        %vm802 = vcmask 126016
        %803 = vst.msk [vmem:[#allocation5] sm:$0xf] %vm802, %v800
        %v804 = vpack.c.bf16 %v772, %v772
        %806 = vrot.lane.b32.xlu0 %v804, 16
        %v807 = vpop.permute.xlu0 %806
        %vm809 = vcmask 191616
        %810 = vst.msk [vmem:[#allocation5] sm:$0xf] %vm809, %v807
        %v811 = vpack.c.bf16 %v791, %v791
        %813 = vrot.lane.b32.xlu0 %v811, 24
        %v814 = vpop.permute.xlu0 %813
        %vm816 = vcmask 257216
        %817 = vst.msk [vmem:[#allocation5] sm:$0xf] %vm816, %v814
        %v818 = vld [vmem:[#allocation5] sm:$0xf]
        %v819 = vld [vmem:[%s3] sm:$0xf]
        %v820 = vld [vmem:[%s3 + $0x4] sm:$0xf]
        %v821 = vld [vmem:[%s3 + $0x8] sm:$0xf]
        %v822 = vld [vmem:[%s3 + $0xc] sm:$0xf]
        %v823 = vld [vmem:[%s4] sm:$0x1]
        %v825 = vperm.slane %v823, 0
        %v831 = vunpack.c.l.b16 %v819
        %v832 = vunpack.c.l.b16 %v820
        %v833 = vunpack.c.l.b16 %v821
        %v834 = vunpack.c.l.b16 %v822
        %v835 = vpack.c.b16 %v832, %v831
        %v836 = vpack.c.b16 %v834, %v833
        %vm839 = vcmask 261120
        %v841 = vsel %vm839, %v818, 0
        %843 = vmatpush.bf16.msra.mxu0 0
        %844 = vmatpush.bf16.msra.mxu0 0
        %845 = vmatpush.bf16.msra.mxu0 0
        %846 = vmatpush.bf16.msra.mxu0 0
        %847 = vmatpush.bf16.msra.mxu0 0
        %848 = vmatpush.bf16.msra.mxu0 0
        %849 = vmatpush.bf16.msra.mxu0 %v836
        %850 = vmatpush.bf16.msra.mxu0 %v835
        %851 = vmatmul.bf16.gmra.mxu0 %v841
        %v852 = vpop.f32.mrf.mxu0
        %v853 = vadd.f32 %v825, %v852
        %v854 = vpop.f32.mrf.mxu0
        %855 = vdwg.mxu0
        %s856 = smul.addr %s576, 4
        %s857 = scalar_lea.vmem %s428, %s856 [#allocation6]
        %v858 = vld [vmem:[%s857] sm:$0xf]
        %v859 = vunpack.c.l.bf16 %v858
        %v860 = vadd.f32 %v859, %v853
        %v861 = vld [vmem:[%s5] sm:$0x1]
        %v862 = vld [vmem:[%s6] sm:$0x1]
        %v863 = vsel %vm839, %v860, 0.0
        %864 = vadd.xlane.f32.xlu0 %v863
        %v865 = vpop.xlane.xlu0 %864
        %v866 = vrcp.pop 32.0
        %v867 = vmul.f32 32.0, %v866
        %v868 = vsub.f32 1.0, %v867
        %v869 = vmul.f32 %v866, %v868
        %v870 = vadd.f32 %v866, %v869
        %vm871 = vweird.f32 %v866
        %v872 = vsel %vm871, %v866, %v870
        %v873 = vmul.f32 %v865, %v872
        %v874 = vsub.f32 %v860, %v873
        %v875 = vmul.f32 %v874, %v874
        %v876 = vsel %vm839, %v875, 0.0
        %877 = vadd.xlane.f32.xlu0 %v876
        %v878 = vpop.xlane.xlu0 %877
        %v879 = vmul.f32 %v878, %v872
        %v880 = vadd.f32 %v879, 1e-05
        %v881 = vrsqrt.pop %v880
        %v882 = vmul.f32 %v881, %v880
        %v883 = vmul.f32 %v882, %v881
        %v884 = vmul.f32 0.5, %v883
        %v885 = vsub.f32 1.5, %v884
        %v886 = vmul.f32 %v881, %v885
        %vm887 = vweird.f32 %v880
        %vm888 = vweird.f32 %v881
        %vm889 = vmor %vm887, %vm888
        %v890 = vsel %vm889, %v881, %v886
        %v891 = vmul.f32 %v874, %v890
        %v893 = vperm.slane %v861, 0
        %v895 = vmul.f32 %v891, %v893
        %v897 = vperm.slane %v862, 0
        %v899 = vadd.f32 %v895, %v897
        %v900 = vpack.c.bf16 %v899, %v899
        %v901 = vld [vmem:[%s7] sm:$0xf]
        %v902 = vld [vmem:[%s7 + $0x4] sm:$0xf]
        %v903 = vld [vmem:[%s7 + $0x8] sm:$0xf]
        %v904 = vld [vmem:[%s7 + $0xc] sm:$0xf]
        %v905 = vld [vmem:[%s8] sm:$0x1]
        %v907 = vperm.slane %v905, 0
        %v913 = vunpack.c.l.b16 %v901
        %v914 = vunpack.c.l.b16 %v902
        %v915 = vunpack.c.l.b16 %v903
        %v916 = vunpack.c.l.b16 %v904
        %v917 = vpack.c.b16 %v914, %v913
        %v918 = vpack.c.b16 %v916, %v915
        %v922 = vsel %vm839, %v900, 0
        %924 = vmatpush.bf16.msra.mxu0 0
        %925 = vmatpush.bf16.msra.mxu0 0
        %926 = vmatpush.bf16.msra.mxu0 0
        %927 = vmatpush.bf16.msra.mxu0 0
        %928 = vmatpush.bf16.msra.mxu0 0
        %929 = vmatpush.bf16.msra.mxu0 0
        %930 = vmatpush.bf16.msra.mxu0 %v918
        %931 = vmatpush.bf16.msra.mxu0 %v917
        %932 = vmatmul.bf16.gmra.mxu0 %v922
        %v933 = vpop.f32.mrf.mxu0
        %v934 = vadd.f32 %v907, %v933
        %v935 = vpop.f32.mrf.mxu0
        %936 = vdwg.mxu0
        %v937 = vmax.f32 %v934, 0.0
        %v938 = vpack.c.bf16 %v937, %v937
        %v939 = vld [vmem:[%s9] sm:$0xf]
        %v940 = vld [vmem:[%s9 + $0x4] sm:$0xf]
        %v941 = vld [vmem:[%s9 + $0x8] sm:$0xf]
        %v942 = vld [vmem:[%s9 + $0xc] sm:$0xf]
        %v943 = vld [vmem:[%s9 + $0x10] sm:$0xf]
        %v944 = vld [vmem:[%s9 + $0x14] sm:$0xf]
        %v945 = vld [vmem:[%s9 + $0x18] sm:$0xf]
        %v946 = vld [vmem:[%s9 + $0x1c] sm:$0xf]
        %v947 = vld [vmem:[%s10] sm:$0x1]
        %v949 = vperm.slane %v947, 0
        %v959 = vunpack.c.l.b16 %v939
        %v960 = vunpack.c.l.b16 %v940
        %v961 = vunpack.c.l.b16 %v941
        %v962 = vunpack.c.l.b16 %v942
        %v963 = vunpack.c.l.b16 %v943
        %v964 = vunpack.c.l.b16 %v944
        %v965 = vunpack.c.l.b16 %v945
        %v966 = vunpack.c.l.b16 %v946
        %v967 = vpack.c.b16 %v960, %v959
        %v968 = vpack.c.b16 %v962, %v961
        %v969 = vpack.c.b16 %v964, %v963
        %v970 = vpack.c.b16 %v966, %v965
        %vm975 = vcmask 523264
        %v977 = vsel %vm975, %v938, 0
        %979 = vmatpush.bf16.msra.mxu0 0
        %980 = vmatpush.bf16.msra.mxu0 0
        %981 = vmatpush.bf16.msra.mxu0 0
        %982 = vmatpush.bf16.msra.mxu0 0
        %983 = vmatpush.bf16.msra.mxu0 %v970
        %984 = vmatpush.bf16.msra.mxu0 %v969
        %985 = vmatpush.bf16.msra.mxu0 %v968
        %986 = vmatpush.bf16.msra.mxu0 %v967
        %987 = vmatmul.bf16.gmra.mxu0 %v977
        %v988 = vpop.f32.mrf.mxu0
        %v989 = vadd.f32 %v949, %v988
        %v990 = vpop.f32.mrf.mxu0
        %991 = vdwg.mxu0
        %v992 = vadd.f32 %v899, %v989
        %v993 = vld [vmem:[%s11] sm:$0x1]
        %v994 = vld [vmem:[%s12] sm:$0x1]
        %v995 = vsel %vm839, %v992, 0.0
        %996 = vadd.xlane.f32.xlu0 %v995
        %v997 = vpop.xlane.xlu0 %996
        %v998 = vmul.f32 %v997, %v872
        %v999 = vsub.f32 %v992, %v998
        %v1000 = vmul.f32 %v999, %v999
        %v1001 = vsel %vm839, %v1000, 0.0
        %1002 = vadd.xlane.f32.xlu0 %v1001
        %v1003 = vpop.xlane.xlu0 %1002
        %v1004 = vmul.f32 %v1003, %v872
        %v1005 = vadd.f32 %v1004, 1e-05
        %v1006 = vrsqrt.pop %v1005
        %v1007 = vmul.f32 %v1006, %v1005
        %v1008 = vmul.f32 %v1007, %v1006
        %v1009 = vmul.f32 0.5, %v1008
        %v1010 = vsub.f32 1.5, %v1009
        %v1011 = vmul.f32 %v1006, %v1010
        %vm1012 = vweird.f32 %v1005
        %vm1013 = vweird.f32 %v1006
        %vm1014 = vmor %vm1012, %vm1013
        %v1015 = vsel %vm1014, %v1006, %v1011
        %v1016 = vmul.f32 %v999, %v1015
        %v1018 = vperm.slane %v993, 0
        %v1020 = vmul.f32 %v1016, %v1018
        %v1022 = vperm.slane %v994, 0
        %v1024 = vadd.f32 %v1020, %v1022
        %1025 = vst.msk [vmem:[%s471] sm:$0xff] %vm839, %v1024
        %s1026 = sand.u32 %s330, 1
        %s1027 = scalar_lea.sflag [#allocation8], %s1026
        %s1028 = sand.u32 %s330, 1
        %s1029 = smul.addr %s1028, 8
        %s1030 = scalar_lea.vmem [#allocation9], %s1029
        // Predicated region
        $region81: #{tpu_custom_call.1} parent=71 // pred_check
          %p1031 = pneg %p340
        $region82: #{tpu_custom_call.1} parent=71 // pred_check_branch
          %1033 = sbr.rel (%p1031) target = $region84
        $region83: #{tpu_custom_call.1} parent=71 // pred_region
          %1035 = vsyncadd %s1027, 0
          %s1036 = sadd.s32 %s35, %s34
          %s1037 = smul.addr %s1036, 8
          %s1038 = scalar_lea.hbm %s13, %s1037
          %s1040 = sshll.u32 %s1030, 4
          %s1041 = int_to_ptr.vmem [resolvable:$true] %s1040
          %s1042 = sshll.u32 %s1038, 4
          %s1043 = int_to_ptr.hbm [resolvable:$true] %s1042
          %1045 = dma.vmem_to_hbm [thread:$0]  %s1041, 128, %s1043, %s1027
        $region84: #{tpu_custom_call.1} parent=71 // pred_fallthru
          _
      $region72: #{tpu_custom_call.1} parent=5 // pred_fallthru
        _
      %p1046 = scmp.le.s32.totalorder 2, %s25
      // Predicated region
      $region85: #{tpu_custom_call.1} parent=5 // pred_check
        %p1047 = pneg %p1046
      $region86: #{tpu_custom_call.1} parent=5 // pred_check_branch
        %1049 = sbr.rel (%p1047) target = $region88
      $region87: #{tpu_custom_call.1} parent=5 // pred_region
        %s1050 = ssub.s32 %s25, 2
        // Predicated region
        $region89: #{tpu_custom_call.1} parent=87 // pred_check
          %p1051 = pneg %p346
        $region90: #{tpu_custom_call.1} parent=87 // pred_check_branch
          %1053 = sbr.rel (%p1051) target = $region92
        $region91: #{tpu_custom_call.1} parent=87 // pred_region
          %s1054 = sand.u32 %s331, 1
          %s1055 = scalar_lea.sflag [#allocation8], %s1054
          %s1056 = sand.u32 %s331, 1
          %s1057 = smul.addr %s1056, 8
          %s1058 = scalar_lea.vmem [#allocation9], %s1057
          %1060 = dma.done %s1055, 128
        $region92: #{tpu_custom_call.1} parent=87 // pred_fallthru
          _
      $region88: #{tpu_custom_call.1} parent=5 // pred_fallthru
        _
    $region6: #{tpu_custom_call.1} parent=1 // loop_footer
      %s29 = sadd.s32 1, %s25
    $region7: #{tpu_custom_call.1} parent=1 // loop_footer_branch
      %24 = sbr.rel target = $region3
    $region8: #{tpu_custom_call.1} parent=1 // loop_exit
      _
    %1061 = vsyncpa [#allocation7], 1
    %s1062 = scalar_lea.sflag [#allocation7], 1
    %1063 = vsyncpa %s1062, 1
    %1064 = vsyncpa [#allocation8], 1
    %s1065 = scalar_lea.sflag [#allocation8], 1
    %1066 = vsyncpa %s1065, 1

</llo_original>
